<compile_context>
chip_gen: v6e
topology: v6e:2x2x1
jax: 0.10.0
libtpu: 0.0.40
codegen_flags: <defaults>
</compile_context>

<pallas_src>
import functools

import numpy as np
import jax
import jax.numpy as jnp
from jax.experimental import pallas as pl
from jax.experimental.pallas import tpu as pltpu


# ----------------------------------------------------------------------------
# Pallas kernel: tiled matmul + bias + optional ReLU (MXU + f32 accumulator).
# ----------------------------------------------------------------------------
_TM_MAX, _TN_MAX, _TK_MAX = 512, 512, 512   # >=256 on N/K when tiled (v6e/v7x MXU)


def _round_up(x, m):
    return ((x + m - 1) // m) * m


def _tile_and_pad(dim, max_tile, mult):
    """Pick a block size for `dim`. Returns (tile, padded_dim).

    dim <= max_tile: single full-extent block -> legal for any size (no (8,128)
    constraint, no pad/slice round trip, lane-dense store iff dim is).
    dim >  max_tile: prefer an aligned tile that divides dim exactly (no padding);
    fall back to padding up to a multiple of max_tile.
    """
    if dim <= max_tile:
        return dim, dim
    if dim % mult == 0:
        t = max_tile
        while t >= mult:
            if dim % t == 0:
                return t, dim
            t -= mult
    return max_tile, _round_up(dim, max_tile)


def _mm_bias_act_kernel(x_ref, w_ref, b_ref, o_ref, acc_ref, *, relu):
    k = pl.program_id(2)

    @pl.when(k == 0)
    def _():
        acc_ref[...] = jnp.zeros_like(acc_ref)

    acc_ref[...] += jnp.dot(x_ref[...], w_ref[...],
                            preferred_element_type=jnp.float32)

    @pl.when(k == pl.num_programs(2) - 1)
    def _():
        out = acc_ref[...] + b_ref[...]          # (1, TN) broadcasts over rows
        if relu:
            out = jnp.maximum(out, 0.0)
        o_ref[...] = out.astype(o_ref.dtype)


def pallas_matmul_bias(x, w, b=None, relu=False, out_dtype=jnp.float32):
    """y = act(x @ w + b); x:(M,K) w:(K,N) b:(N,)|None -> (M,N).

    Inputs are cast to bf16 (f32 accumulation in VMEM scratch).  Tiles are chosen
    adaptively; padding/slicing only happens when a dim is both larger than the max
    tile and not divisible by an aligned tile.
    """
    M, K = x.shape
    K2, N = w.shape
    assert K == K2
    if b is None:
        b = jnp.zeros((N,), jnp.float32)

    tm, Mp = _tile_and_pad(M, _TM_MAX, 8)
    tk, Kp = _tile_and_pad(K, _TK_MAX, 128)
    tn, Np = _tile_and_pad(N, _TN_MAX, 128)

    xp = x.astype(jnp.bfloat16)
    wp = w.astype(jnp.bfloat16)
    bp = b.astype(jnp.float32).reshape(1, N)
    if (Mp, Kp) != (M, K):
        xp = jnp.pad(xp, ((0, Mp - M), (0, Kp - K)))
    if (Kp, Np) != (K, N):
        wp = jnp.pad(wp, ((0, Kp - K), (0, Np - N)))
    if Np != N:
        bp = jnp.pad(bp, ((0, 0), (0, Np - N)))

    grid = (Mp // tm, Np // tn, Kp // tk)

    # Double-buffered VMEM need for these tiles; clamp the request to [32, 48] MiB
    # so it is safe on v7x's 64 MiB physical VMEM and >= the default everywhere.
    out_isz = jnp.dtype(out_dtype).itemsize
    vmem_need = (2 * (tm * tk + tk * tn) * 2 + 2 * tn * 4
                 + 2 * tm * tn * out_isz + tm * tn * 4)
    vmem_limit = int(min(48 << 20, max(2 * vmem_need + (8 << 20), 32 << 20)))

    out = pl.pallas_call(
        functools.partial(_mm_bias_act_kernel, relu=relu),
        out_shape=jax.ShapeDtypeStruct((Mp, Np), out_dtype),
        grid_spec=pltpu.PrefetchScalarGridSpec(
            num_scalar_prefetch=0,
            grid=grid,
            in_specs=[
                pl.BlockSpec((tm, tk), lambda i, j, k: (i, k)),
                pl.BlockSpec((tk, tn), lambda i, j, k: (k, j)),
                pl.BlockSpec((1, tn), lambda i, j, k: (0, j)),
            ],
            out_specs=pl.BlockSpec((tm, tn), lambda i, j, k: (i, j)),
            scratch_shapes=[pltpu.VMEM((tm, tn), jnp.float32)],
        ),
        compiler_params=pltpu.CompilerParams(
            # (i, j) tiles are independent -> shardable across the 2 TCs on v7x.
            dimension_semantics=("parallel", "parallel", "arbitrary"),
            vmem_limit_bytes=vmem_limit,
        ),
    )(xp, wp, bp)
    if (Mp, Np) != (M, N):
        out = out[:M, :N]
    return out


# ----------------------------------------------------------------------------
# NHWC im2col glue: conv2d == one Pallas matmul, no layout transpose needed.
# ----------------------------------------------------------------------------
def _im2col_nhwc(x, kh, kw, stride, pad, dilation=1):
    # x: (N, H, W, C) -> (N*oh*ow, kh*kw*C); channel axis stays on the lane dim.
    # TODO(synk): replace with an in-kernel DMA gather for non-toy activations.
    N, H, W, C = x.shape
    xp = jnp.pad(x, ((0, 0), (pad, pad), (pad, pad), (0, 0)))
    Hp, Wp = H + 2 * pad, W + 2 * pad
    oh = (Hp - dilation * (kh - 1) - 1) // stride + 1
    ow = (Wp - dilation * (kw - 1) - 1) // stride + 1
    patches = []
    for i in range(kh):
        for j in range(kw):
            patches.append(
                xp[:, i * dilation: i * dilation + stride * (oh - 1) + 1: stride,
                      j * dilation: j * dilation + stride * (ow - 1) + 1: stride, :])
    cols = jnp.concatenate(patches, axis=-1)              # (N, oh, ow, kh*kw*C)
    return cols.reshape(N * oh * ow, kh * kw * C), oh, ow


def conv2d_nhwc(x, weight, bias, stride=1, pad=0, dilation=1, relu=False,
                out_dtype=jnp.bfloat16):
    """PyTorch-semantics Conv2d on NHWC activations.  weight: (Cout, Cin, kh, kw)."""
    Cout, Cin, kh, kw = weight.shape
    Nb = x.shape[0]
    if kh == 1 and kw == 1 and stride == 1 and pad == 0:
        _, H, W, C = x.shape
        cols, oh, ow = x.reshape(Nb * H * W, C), H, W
        w2 = weight.reshape(Cout, Cin).T
    else:
        cols, oh, ow = _im2col_nhwc(x, kh, kw, stride, pad, dilation)
        # column order of im2col is (i, j, cin) -> match with (kh, kw, Cin, Cout)
        w2 = weight.transpose(2, 3, 1, 0).reshape(kh * kw * Cin, Cout)
    y = pallas_matmul_bias(cols, w2, bias, relu=relu, out_dtype=out_dtype)
    return y.reshape(Nb, oh, ow, Cout)


# ----------------------------------------------------------------------------
# Bilinear upsample (align_corners=False) as TWO separable, lane-dense matmuls.
# ----------------------------------------------------------------------------
def _bilinear_matrix(out_size, in_size):
    W = np.zeros((out_size, in_size), dtype=np.float32)
    if in_size == 1:
        W[:, 0] = 1.0
        return W
    scale = in_size / out_size
    for i in range(out_size):
        src = max((i + 0.5) * scale - 0.5, 0.0)
        i0 = min(int(np.floor(src)), in_size - 1)
        i1 = min(i0 + 1, in_size - 1)
        lam = src - i0
        W[i, i0] += 1.0 - lam
        W[i, i1] += lam
    return W


def bilinear_upsample_to_nchw(logits_nhwc, out_h, out_w):
    """Separable bilinear upsample -> NCHW output, no Kronecker blow-up.

    pass 1 (rows):  Wy (out_h, h) @ logits^(h, Nb*w*C)        lane dim = Nb*w*C
    pass 2 (cols):  logits^(Nb*C*out_h, w) @ Wx^T (w, out_w)   lane dim = out_w
    Pass 2 writes the final NCHW layout directly (no transpose of the big output).
    """
    Nb, h, w, c = logits_nhwc.shape
    wy = jnp.asarray(_bilinear_matrix(out_h, h))            # (out_h, h)
    wxT = jnp.asarray(_bilinear_matrix(out_w, w).T)         # (w, out_w)

    rows_in = logits_nhwc.transpose(1, 0, 2, 3).reshape(h, Nb * w * c)
    t = pallas_matmul_bias(wy, rows_in, out_dtype=jnp.float32)      # (out_h, Nb*w*c)
    t = t.reshape(out_h, Nb, w, c).transpose(1, 3, 0, 2).reshape(Nb * c * out_h, w)
    up = pallas_matmul_bias(t, wxT, out_dtype=jnp.float32)          # (Nb*c*out_h, out_w)
    return up.reshape(Nb, c, out_h, out_w)                          # NCHW


# ----------------------------------------------------------------------------
# SingleTaskModel forward (task='segment').
# ----------------------------------------------------------------------------
def init_params(key, c_in=4, c_feat=32, c_branch=16, num_classes=5):
    ks = jax.random.split(key, 12)
    p = {}
    # backbone: two stride-2 3x3 convs
    p["bb1_w"] = 0.1 * jax.random.normal(ks[0], (16, c_in, 3, 3), jnp.float32)
    p["bb1_b"] = jnp.zeros((16,), jnp.float32)
    p["bb2_w"] = 0.1 * jax.random.normal(ks[1], (c_feat, 16, 3, 3), jnp.float32)
    p["bb2_b"] = jnp.zeros((c_feat,), jnp.float32)
    # ASPP-lite head
    p["a1_w"] = 0.1 * jax.random.normal(ks[2], (c_branch, c_feat, 1, 1), jnp.float32)
    p["a1_b"] = jnp.zeros((c_branch,), jnp.float32)
    p["a2_w"] = 0.1 * jax.random.normal(ks[3], (c_branch, c_feat, 3, 3), jnp.float32)
    p["a2_b"] = jnp.zeros((c_branch,), jnp.float32)
    p["ap_w"] = 0.1 * jax.random.normal(ks[4], (c_branch, c_feat, 1, 1), jnp.float32)
    p["ap_b"] = jnp.zeros((c_branch,), jnp.float32)
    p["cls_w"] = 0.1 * jax.random.normal(ks[5], (num_classes, 3 * c_branch, 1, 1),
                                         jnp.float32)
    p["cls_b"] = jnp.zeros((num_classes,), jnp.float32)
    return p


def single_task_model_forward(params, x_nchw):
    """x: (N, C, H, W) NCHW.  Returns {'segment': (N, num_classes, H, W)}."""
    out_h, out_w = x_nchw.shape[2], x_nchw.shape[3]
    x = jnp.transpose(x_nchw, (0, 2, 3, 1)).astype(jnp.bfloat16)   # NHWC internally

    # ---- base_net(x)[-1]: deepest backbone feature map ----
    f1 = conv2d_nhwc(x, params["bb1_w"], params["bb1_b"], stride=2, pad=1, relu=True)
    feat = conv2d_nhwc(f1, params["bb2_w"], params["bb2_b"], stride=2, pad=1, relu=True)
    Nb, h, w, C = feat.shape
    Cb = params["a1_w"].shape[0]
    ncls = params["cls_w"].shape[0]

    # ---- ASPP-lite head (3 Pallas matmuls + tiny per-batch pool path) ----
    # (a) 1x1 branch fused into the dilated-3x3 branch matmul: the dilated im2col
    #     columns already contain the centre-tap (unshifted) channels, so a1_w is
    #     placed on those rows of a widened weight matrix; the single matmul emits
    #     [b2 | b1] with feat read once and NO discarded cross-block MXU work.
    cols, _, _ = _im2col_nhwc(feat, 3, 3, stride=1, pad=2, dilation=2)   # (M, 9C)
    w_d3 = params["a2_w"].transpose(2, 3, 1, 0).reshape(9 * C, Cb)
    w_1x1 = jnp.zeros((9 * C, Cb), jnp.float32).at[4 * C:5 * C, :].set(
        params["a1_w"].reshape(Cb, C).T)                                 # centre tap
    w_branch = jnp.concatenate([w_d3, w_1x1], axis=1)                    # (9C, 2Cb)
    b_branch = jnp.concatenate([params["a2_b"], params["a1_b"]])
    branches = pallas_matmul_bias(cols, w_branch, b_branch, relu=True,
                                  out_dtype=jnp.bfloat16)                # (M, 2Cb)=[b2|b1]

    # (b) global-pool branch: only M = Nb rows -> tiny dedicated matmul.
    pooled = jnp.mean(feat.astype(jnp.float32), axis=(1, 2)).astype(jnp.bfloat16)
    gp = pallas_matmul_bias(pooled, params["ap_w"].reshape(Cb, C).T,
                            params["ap_b"], relu=True, out_dtype=jnp.float32)  # (Nb, Cb)

    # (c) classifier 1x1 over cat(b1, b2, b3): b1/b2 contribution is one matmul over
    #     K = 2*Cb on the fused branch output (no (Nb,h,w,3Cb) concat materialised);
    #     the spatially-constant b3 contribution is a per-batch offset added after
    #     (classifier is linear, so this is exact).
    w_cls = params["cls_w"].reshape(ncls, 3 * Cb).T                      # rows: [b1|b2|b3]
    w_cls_b2b1 = jnp.concatenate([w_cls[Cb:2 * Cb], w_cls[:Cb]], axis=0) # (2Cb, ncls)
    logits = pallas_matmul_bias(branches, w_cls_b2b1, params["cls_b"],
                                out_dtype=jnp.float32).reshape(Nb, h, w, ncls)
    offset = jnp.dot(gp, w_cls[2 * Cb:])   # (Nb, ncls); O(Nb*Cb*ncls) XLA glue
    logits = logits + offset[:, None, None, :]

    # ---- F.interpolate(out, out_size, mode='bilinear') ----
    out = bilinear_upsample_to_nchw(logits, out_h, out_w)
    return {"segment": out}


if __name__ == "__main__":
    key = jax.random.PRNGKey(0)
    k_param, k_x = jax.random.split(key)
    params = init_params(k_param)
    x = jax.random.normal(k_x, (2, 4, 16, 16), jnp.float32)   # NCHW, like PyTorch

    fwd = jax.jit(single_task_model_forward)
    result = fwd(params, x)
    out = jax.block_until_ready(result["segment"])

    assert out.shape == (2, 5, 16, 16), out.shape
    assert bool(jnp.all(jnp.isfinite(out)))
    print("KERNEL_OK")
</pallas_src>

<mosaic_0001>
module attributes {stable_mosaic.version = 11 : i64} {
  func.func @_mm_bias_act_kernel(%arg0: i32, %arg1: i32, %arg2: i32, %arg3: memref<128x36xbf16, #tpu.memory_space<vmem>>, %arg4: memref<36x16xbf16, #tpu.memory_space<vmem>>, %arg5: memref<1x16xf32, #tpu.memory_space<vmem>>, %arg6: memref<128x16xbf16, #tpu.memory_space<vmem>>, %arg7: memref<128x16xf32, #tpu.memory_space<vmem>>) attributes {dimension_semantics = [#tpu.dimension_semantics<parallel>, #tpu.dimension_semantics<parallel>, #tpu.dimension_semantics<arbitrary>], iteration_bounds = array<i64: 1, 1, 1>, scalar_prefetch = 0 : i64, scratch_operands = 1 : i64, tpu.core_type = #tpu.core_type<tc>, window_params = [{transform_indices = @transform_0, window_bounds = array<i64: 128, 36>}, {transform_indices = @transform_1, window_bounds = array<i64: 36, 16>}, {transform_indices = @transform_2, window_bounds = array<i64: 1, 16>}, {transform_indices = @transform_3, window_bounds = array<i64: 128, 16>}]} {
    %c0_i32 = arith.constant 0 : i32
    %0 = arith.cmpi eq, %arg2, %c0_i32 : i32
    %1 = arith.extui %0 : i1 to i32
    %c0_i32_0 = arith.constant 0 : i32
    %2 = arith.cmpi ne, %1, %c0_i32_0 : i32
    scf.if %2 {
      %cst_10 = arith.constant 0.000000e+00 : f32
      %12 = vector.broadcast %cst_10 : f32 to vector<128x16xf32>
      %c0_11 = arith.constant 0 : index
      %c0_12 = arith.constant 0 : index
      %13 = vector.load %arg7[%c0_11, %c0_12] : memref<128x16xf32, #tpu.memory_space<vmem>>, vector<128x16xf32>
      tpu.vector_store %arg7[%c0_11, %c0_12], %12 {strides = array<i32>} : memref<128x16xf32, #tpu.memory_space<vmem>>, vector<128x16xf32>,
    } else {
    }
    %c0 = arith.constant 0 : index
    %c0_1 = arith.constant 0 : index
    %3 = vector.load %arg7[%c0, %c0_1] : memref<128x16xf32, #tpu.memory_space<vmem>>, vector<128x16xf32>
    %c0_2 = arith.constant 0 : index
    %c0_3 = arith.constant 0 : index
    %4 = vector.load %arg3[%c0_2, %c0_3] : memref<128x36xbf16, #tpu.memory_space<vmem>>, vector<128x36xbf16>
    %c0_4 = arith.constant 0 : index
    %c0_5 = arith.constant 0 : index
    %5 = vector.load %arg4[%c0_4, %c0_5] : memref<36x16xbf16, #tpu.memory_space<vmem>>, vector<36x16xbf16>
    %cst = arith.constant dense<0.000000e+00> : vector<128x16xf32>
    %6 = tpu.matmul %4, %5, %cst {dimension_numbers = #tpu.dot_dimension_numbers<[1], [0], [0], [1], [0, 0, 1, 1], [], []>} : vector<128x36xbf16>, vector<36x16xbf16>, vector<128x16xf32> -> vector<128x16xf32>
    %7 = arith.addf %3, %6 : vector<128x16xf32>
    %c0_6 = arith.constant 0 : index
    %c0_7 = arith.constant 0 : index
    %8 = vector.load %arg7[%c0_6, %c0_7] : memref<128x16xf32, #tpu.memory_space<vmem>>, vector<128x16xf32>
    tpu.vector_store %arg7[%c0_6, %c0_7], %7 {strides = array<i32>} : memref<128x16xf32, #tpu.memory_space<vmem>>, vector<128x16xf32>,
    %c0_i32_8 = arith.constant 0 : i32
    %9 = arith.cmpi eq, %arg2, %c0_i32_8 : i32
    %10 = arith.extui %9 : i1 to i32
    %c0_i32_9 = arith.constant 0 : i32
    %11 = arith.cmpi ne, %10, %c0_i32_9 : i32
    scf.if %11 {
      %c0_10 = arith.constant 0 : index
      %c0_11 = arith.constant 0 : index
      %12 = vector.load %arg7[%c0_10, %c0_11] : memref<128x16xf32, #tpu.memory_space<vmem>>, vector<128x16xf32>
      %c0_12 = arith.constant 0 : index
      %c0_13 = arith.constant 0 : index
      %13 = vector.load %arg5[%c0_12, %c0_13] : memref<1x16xf32, #tpu.memory_space<vmem>>, vector<1x16xf32>
      %14 = vector.broadcast %13 : vector<1x16xf32> to vector<128x16xf32>
      %15 = arith.addf %12, %14 : vector<128x16xf32>
      %cst_14 = arith.constant 0.000000e+00 : f32
      %16 = vector.broadcast %cst_14 : f32 to vector<128x16xf32>
      %17 = arith.maximumf %15, %16 : vector<128x16xf32>
      %18 = arith.truncf %17 : vector<128x16xf32> to vector<128x16xbf16>
      %c0_15 = arith.constant 0 : index
      %c0_16 = arith.constant 0 : index
      %19 = vector.load %arg6[%c0_15, %c0_16] : memref<128x16xbf16, #tpu.memory_space<vmem>>, vector<128x16xbf16>
      tpu.vector_store %arg6[%c0_15, %c0_16], %18 {strides = array<i32>} : memref<128x16xbf16, #tpu.memory_space<vmem>>, vector<128x16xbf16>,
    } else {
    }
    return
  }
  func.func @transform_0(%arg0: i32, %arg1: i32, %arg2: i32) -> (i32, i32) {
    %c0_i32 = arith.constant 0 : i32
    return %arg0, %arg2 : i32, i32
  }
  func.func @transform_1(%arg0: i32, %arg1: i32, %arg2: i32) -> (i32, i32) {
    %c0_i32 = arith.constant 0 : i32
    return %arg2, %arg1 : i32, i32
  }
  func.func @transform_2(%arg0: i32, %arg1: i32, %arg2: i32) -> (i32, i32) {
    %c0_i32 = arith.constant 0 : i32
    %c0_i32_0 = arith.constant 0 : i32
    return %c0_i32, %arg1 : i32, i32
  }
  func.func @transform_3(%arg0: i32, %arg1: i32, %arg2: i32) -> (i32, i32) {
    %c0_i32 = arith.constant 0 : i32
    return %arg0, %arg1 : i32, i32
  }
}

module attributes {stable_mosaic.version = 11 : i64} {
  func.func @_mm_bias_act_kernel(%arg0: i32, %arg1: i32, %arg2: i32, %arg3: memref<32x144xbf16, #tpu.memory_space<vmem>>, %arg4: memref<144x32xbf16, #tpu.memory_space<vmem>>, %arg5: memref<1x32xf32, #tpu.memory_space<vmem>>, %arg6: memref<32x32xbf16, #tpu.memory_space<vmem>>, %arg7: memref<32x32xf32, #tpu.memory_space<vmem>>) attributes {dimension_semantics = [#tpu.dimension_semantics<parallel>, #tpu.dimension_semantics<parallel>, #tpu.dimension_semantics<arbitrary>], iteration_bounds = array<i64: 1, 1, 1>, scalar_prefetch = 0 : i64, scratch_operands = 1 : i64, tpu.core_type = #tpu.core_type<tc>, window_params = [{transform_indices = @transform_0, window_bounds = array<i64: 32, 144>}, {transform_indices = @transform_1, window_bounds = array<i64: 144, 32>}, {transform_indices = @transform_2, window_bounds = array<i64: 1, 32>}, {transform_indices = @transform_3, window_bounds = array<i64: 32, 32>}]} {
    %c0_i32 = arith.constant 0 : i32
    %0 = arith.cmpi eq, %arg2, %c0_i32 : i32
    %1 = arith.extui %0 : i1 to i32
    %c0_i32_0 = arith.constant 0 : i32
    %2 = arith.cmpi ne, %1, %c0_i32_0 : i32
    scf.if %2 {
      %cst_10 = arith.constant 0.000000e+00 : f32
      %12 = vector.broadcast %cst_10 : f32 to vector<32x32xf32>
      %c0_11 = arith.constant 0 : index
      %c0_12 = arith.constant 0 : index
      %13 = vector.load %arg7[%c0_11, %c0_12] : memref<32x32xf32, #tpu.memory_space<vmem>>, vector<32x32xf32>
      tpu.vector_store %arg7[%c0_11, %c0_12], %12 {strides = array<i32>} : memref<32x32xf32, #tpu.memory_space<vmem>>, vector<32x32xf32>,
    } else {
    }
    %c0 = arith.constant 0 : index
    %c0_1 = arith.constant 0 : index
    %3 = vector.load %arg7[%c0, %c0_1] : memref<32x32xf32, #tpu.memory_space<vmem>>, vector<32x32xf32>
    %c0_2 = arith.constant 0 : index
    %c0_3 = arith.constant 0 : index
    %4 = vector.load %arg3[%c0_2, %c0_3] : memref<32x144xbf16, #tpu.memory_space<vmem>>, vector<32x144xbf16>
    %c0_4 = arith.constant 0 : index
    %c0_5 = arith.constant 0 : index
    %5 = vector.load %arg4[%c0_4, %c0_5] : memref<144x32xbf16, #tpu.memory_space<vmem>>, vector<144x32xbf16>
    %cst = arith.constant dense<0.000000e+00> : vector<32x32xf32>
    %6 = tpu.matmul %4, %5, %cst {dimension_numbers = #tpu.dot_dimension_numbers<[1], [0], [0], [1], [0, 0, 1, 1], [], []>} : vector<32x144xbf16>, vector<144x32xbf16>, vector<32x32xf32> -> vector<32x32xf32>
    %7 = arith.addf %3, %6 : vector<32x32xf32>
    %c0_6 = arith.constant 0 : index
    %c0_7 = arith.constant 0 : index
    %8 = vector.load %arg7[%c0_6, %c0_7] : memref<32x32xf32, #tpu.memory_space<vmem>>, vector<32x32xf32>
    tpu.vector_store %arg7[%c0_6, %c0_7], %7 {strides = array<i32>} : memref<32x32xf32, #tpu.memory_space<vmem>>, vector<32x32xf32>,
    %c0_i32_8 = arith.constant 0 : i32
    %9 = arith.cmpi eq, %arg2, %c0_i32_8 : i32
    %10 = arith.extui %9 : i1 to i32
    %c0_i32_9 = arith.constant 0 : i32
    %11 = arith.cmpi ne, %10, %c0_i32_9 : i32
    scf.if %11 {
      %c0_10 = arith.constant 0 : index
      %c0_11 = arith.constant 0 : index
      %12 = vector.load %arg7[%c0_10, %c0_11] : memref<32x32xf32, #tpu.memory_space<vmem>>, vector<32x32xf32>
      %c0_12 = arith.constant 0 : index
      %c0_13 = arith.constant 0 : index
      %13 = vector.load %arg5[%c0_12, %c0_13] : memref<1x32xf32, #tpu.memory_space<vmem>>, vector<1x32xf32>
      %14 = vector.broadcast %13 : vector<1x32xf32> to vector<32x32xf32>
      %15 = arith.addf %12, %14 : vector<32x32xf32>
      %cst_14 = arith.constant 0.000000e+00 : f32
      %16 = vector.broadcast %cst_14 : f32 to vector<32x32xf32>
      %17 = arith.maximumf %15, %16 : vector<32x32xf32>
      %18 = arith.truncf %17 : vector<32x32xf32> to vector<32x32xbf16>
      %c0_15 = arith.constant 0 : index
      %c0_16 = arith.constant 0 : index
      %19 = vector.load %arg6[%c0_15, %c0_16] : memref<32x32xbf16, #tpu.memory_space<vmem>>, vector<32x32xbf16>
      tpu.vector_store %arg6[%c0_15, %c0_16], %18 {strides = array<i32>} : memref<32x32xbf16, #tpu.memory_space<vmem>>, vector<32x32xbf16>,
    } else {
    }
    return
  }
  func.func @transform_0(%arg0: i32, %arg1: i32, %arg2: i32) -> (i32, i32) {
    %c0_i32 = arith.constant 0 : i32
    return %arg0, %arg2 : i32, i32
  }
  func.func @transform_1(%arg0: i32, %arg1: i32, %arg2: i32) -> (i32, i32) {
    %c0_i32 = arith.constant 0 : i32
    return %arg2, %arg1 : i32, i32
  }
  func.func @transform_2(%arg0: i32, %arg1: i32, %arg2: i32) -> (i32, i32) {
    %c0_i32 = arith.constant 0 : i32
    %c0_i32_0 = arith.constant 0 : i32
    return %c0_i32, %arg1 : i32, i32
  }
  func.func @transform_3(%arg0: i32, %arg1: i32, %arg2: i32) -> (i32, i32) {
    %c0_i32 = arith.constant 0 : i32
    return %arg0, %arg1 : i32, i32
  }
}

module attributes {stable_mosaic.version = 11 : i64} {
  func.func @_mm_bias_act_kernel(%arg0: i32, %arg1: i32, %arg2: i32, %arg3: memref<32x32xbf16, #tpu.memory_space<vmem>>, %arg4: memref<32x5xbf16, #tpu.memory_space<vmem>>, %arg5: memref<1x5xf32, #tpu.memory_space<vmem>>, %arg6: memref<32x5xf32, #tpu.memory_space<vmem>>, %arg7: memref<32x5xf32, #tpu.memory_space<vmem>>) attributes {dimension_semantics = [#tpu.dimension_semantics<parallel>, #tpu.dimension_semantics<parallel>, #tpu.dimension_semantics<arbitrary>], iteration_bounds = array<i64: 1, 1, 1>, scalar_prefetch = 0 : i64, scratch_operands = 1 : i64, tpu.core_type = #tpu.core_type<tc>, window_params = [{transform_indices = @transform_0, window_bounds = array<i64: 32, 32>}, {transform_indices = @transform_1, window_bounds = array<i64: 32, 5>}, {transform_indices = @transform_2, window_bounds = array<i64: 1, 5>}, {transform_indices = @transform_3, window_bounds = array<i64: 32, 5>}]} {
    %c0_i32 = arith.constant 0 : i32
    %0 = arith.cmpi eq, %arg2, %c0_i32 : i32
    %1 = arith.extui %0 : i1 to i32
    %c0_i32_0 = arith.constant 0 : i32
    %2 = arith.cmpi ne, %1, %c0_i32_0 : i32
    scf.if %2 {
      %cst_10 = arith.constant 0.000000e+00 : f32
      %12 = vector.broadcast %cst_10 : f32 to vector<32x5xf32>
      %c0_11 = arith.constant 0 : index
      %c0_12 = arith.constant 0 : index
      %13 = vector.load %arg7[%c0_11, %c0_12] : memref<32x5xf32, #tpu.memory_space<vmem>>, vector<32x5xf32>
      tpu.vector_store %arg7[%c0_11, %c0_12], %12 {strides = array<i32>} : memref<32x5xf32, #tpu.memory_space<vmem>>, vector<32x5xf32>,
    } else {
    }
    %c0 = arith.constant 0 : index
    %c0_1 = arith.constant 0 : index
    %3 = vector.load %arg7[%c0, %c0_1] : memref<32x5xf32, #tpu.memory_space<vmem>>, vector<32x5xf32>
    %c0_2 = arith.constant 0 : index
    %c0_3 = arith.constant 0 : index
    %4 = vector.load %arg3[%c0_2, %c0_3] : memref<32x32xbf16, #tpu.memory_space<vmem>>, vector<32x32xbf16>
    %c0_4 = arith.constant 0 : index
    %c0_5 = arith.constant 0 : index
    %5 = vector.load %arg4[%c0_4, %c0_5] : memref<32x5xbf16, #tpu.memory_space<vmem>>, vector<32x5xbf16>
    %cst = arith.constant dense<0.000000e+00> : vector<32x5xf32>
    %6 = tpu.matmul %4, %5, %cst {dimension_numbers = #tpu.dot_dimension_numbers<[1], [0], [0], [1], [0, 0, 1, 1], [], []>} : vector<32x32xbf16>, vector<32x5xbf16>, vector<32x5xf32> -> vector<32x5xf32>
    %7 = arith.addf %3, %6 : vector<32x5xf32>
    %c0_6 = arith.constant 0 : index
    %c0_7 = arith.constant 0 : index
    %8 = vector.load %arg7[%c0_6, %c0_7] : memref<32x5xf32, #tpu.memory_space<vmem>>, vector<32x5xf32>
    tpu.vector_store %arg7[%c0_6, %c0_7], %7 {strides = array<i32>} : memref<32x5xf32, #tpu.memory_space<vmem>>, vector<32x5xf32>,
    %c0_i32_8 = arith.constant 0 : i32
    %9 = arith.cmpi eq, %arg2, %c0_i32_8 : i32
    %10 = arith.extui %9 : i1 to i32
    %c0_i32_9 = arith.constant 0 : i32
    %11 = arith.cmpi ne, %10, %c0_i32_9 : i32
    scf.if %11 {
      %c0_10 = arith.constant 0 : index
      %c0_11 = arith.constant 0 : index
      %12 = vector.load %arg7[%c0_10, %c0_11] : memref<32x5xf32, #tpu.memory_space<vmem>>, vector<32x5xf32>
      %c0_12 = arith.constant 0 : index
      %c0_13 = arith.constant 0 : index
      %13 = vector.load %arg5[%c0_12, %c0_13] : memref<1x5xf32, #tpu.memory_space<vmem>>, vector<1x5xf32>
      %14 = vector.broadcast %13 : vector<1x5xf32> to vector<32x5xf32>
      %15 = arith.addf %12, %14 : vector<32x5xf32>
      %c0_14 = arith.constant 0 : index
      %c0_15 = arith.constant 0 : index
      %16 = vector.load %arg6[%c0_14, %c0_15] : memref<32x5xf32, #tpu.memory_space<vmem>>, vector<32x5xf32>
      tpu.vector_store %arg6[%c0_14, %c0_15], %15 {strides = array<i32>} : memref<32x5xf32, #tpu.memory_space<vmem>>, vector<32x5xf32>,
    } else {
    }
    return
  }
  func.func @transform_0(%arg0: i32, %arg1: i32, %arg2: i32) -> (i32, i32) {
    %c0_i32 = arith.constant 0 : i32
    return %arg0, %arg2 : i32, i32
  }
  func.func @transform_1(%arg0: i32, %arg1: i32, %arg2: i32) -> (i32, i32) {
    %c0_i32 = arith.constant 0 : i32
    return %arg2, %arg1 : i32, i32
  }
  func.func @transform_2(%arg0: i32, %arg1: i32, %arg2: i32) -> (i32, i32) {
    %c0_i32 = arith.constant 0 : i32
    %c0_i32_0 = arith.constant 0 : i32
    return %c0_i32, %arg1 : i32, i32
  }
  func.func @transform_3(%arg0: i32, %arg1: i32, %arg2: i32) -> (i32, i32) {
    %c0_i32 = arith.constant 0 : i32
    return %arg0, %arg1 : i32, i32
  }
}

module attributes {stable_mosaic.version = 11 : i64} {
  func.func @_mm_bias_act_kernel(%arg0: i32, %arg1: i32, %arg2: i32, %arg3: memref<32x288xbf16, #tpu.memory_space<vmem>>, %arg4: memref<288x32xbf16, #tpu.memory_space<vmem>>, %arg5: memref<1x32xf32, #tpu.memory_space<vmem>>, %arg6: memref<32x32xbf16, #tpu.memory_space<vmem>>, %arg7: memref<32x32xf32, #tpu.memory_space<vmem>>) attributes {dimension_semantics = [#tpu.dimension_semantics<parallel>, #tpu.dimension_semantics<parallel>, #tpu.dimension_semantics<arbitrary>], iteration_bounds = array<i64: 1, 1, 1>, scalar_prefetch = 0 : i64, scratch_operands = 1 : i64, tpu.core_type = #tpu.core_type<tc>, window_params = [{transform_indices = @transform_0, window_bounds = array<i64: 32, 288>}, {transform_indices = @transform_1, window_bounds = array<i64: 288, 32>}, {transform_indices = @transform_2, window_bounds = array<i64: 1, 32>}, {transform_indices = @transform_3, window_bounds = array<i64: 32, 32>}]} {
    %c0_i32 = arith.constant 0 : i32
    %0 = arith.cmpi eq, %arg2, %c0_i32 : i32
    %1 = arith.extui %0 : i1 to i32
    %c0_i32_0 = arith.constant 0 : i32
    %2 = arith.cmpi ne, %1, %c0_i32_0 : i32
    scf.if %2 {
      %cst_10 = arith.constant 0.000000e+00 : f32
      %12 = vector.broadcast %cst_10 : f32 to vector<32x32xf32>
      %c0_11 = arith.constant 0 : index
      %c0_12 = arith.constant 0 : index
      %13 = vector.load %arg7[%c0_11, %c0_12] : memref<32x32xf32, #tpu.memory_space<vmem>>, vector<32x32xf32>
      tpu.vector_store %arg7[%c0_11, %c0_12], %12 {strides = array<i32>} : memref<32x32xf32, #tpu.memory_space<vmem>>, vector<32x32xf32>,
    } else {
    }
    %c0 = arith.constant 0 : index
    %c0_1 = arith.constant 0 : index
    %3 = vector.load %arg7[%c0, %c0_1] : memref<32x32xf32, #tpu.memory_space<vmem>>, vector<32x32xf32>
    %c0_2 = arith.constant 0 : index
    %c0_3 = arith.constant 0 : index
    %4 = vector.load %arg3[%c0_2, %c0_3] : memref<32x288xbf16, #tpu.memory_space<vmem>>, vector<32x288xbf16>
    %c0_4 = arith.constant 0 : index
    %c0_5 = arith.constant 0 : index
    %5 = vector.load %arg4[%c0_4, %c0_5] : memref<288x32xbf16, #tpu.memory_space<vmem>>, vector<288x32xbf16>
    %cst = arith.constant dense<0.000000e+00> : vector<32x32xf32>
    %6 = tpu.matmul %4, %5, %cst {dimension_numbers = #tpu.dot_dimension_numbers<[1], [0], [0], [1], [0, 0, 1, 1], [], []>} : vector<32x288xbf16>, vector<288x32xbf16>, vector<32x32xf32> -> vector<32x32xf32>
    %7 = arith.addf %3, %6 : vector<32x32xf32>
    %c0_6 = arith.constant 0 : index
    %c0_7 = arith.constant 0 : index
    %8 = vector.load %arg7[%c0_6, %c0_7] : memref<32x32xf32, #tpu.memory_space<vmem>>, vector<32x32xf32>
    tpu.vector_store %arg7[%c0_6, %c0_7], %7 {strides = array<i32>} : memref<32x32xf32, #tpu.memory_space<vmem>>, vector<32x32xf32>,
    %c0_i32_8 = arith.constant 0 : i32
    %9 = arith.cmpi eq, %arg2, %c0_i32_8 : i32
    %10 = arith.extui %9 : i1 to i32
    %c0_i32_9 = arith.constant 0 : i32
    %11 = arith.cmpi ne, %10, %c0_i32_9 : i32
    scf.if %11 {
      %c0_10 = arith.constant 0 : index
      %c0_11 = arith.constant 0 : index
      %12 = vector.load %arg7[%c0_10, %c0_11] : memref<32x32xf32, #tpu.memory_space<vmem>>, vector<32x32xf32>
      %c0_12 = arith.constant 0 : index
      %c0_13 = arith.constant 0 : index
      %13 = vector.load %arg5[%c0_12, %c0_13] : memref<1x32xf32, #tpu.memory_space<vmem>>, vector<1x32xf32>
      %14 = vector.broadcast %13 : vector<1x32xf32> to vector<32x32xf32>
      %15 = arith.addf %12, %14 : vector<32x32xf32>
      %cst_14 = arith.constant 0.000000e+00 : f32
      %16 = vector.broadcast %cst_14 : f32 to vector<32x32xf32>
      %17 = arith.maximumf %15, %16 : vector<32x32xf32>
      %18 = arith.truncf %17 : vector<32x32xf32> to vector<32x32xbf16>
      %c0_15 = arith.constant 0 : index
      %c0_16 = arith.constant 0 : index
      %19 = vector.load %arg6[%c0_15, %c0_16] : memref<32x32xbf16, #tpu.memory_space<vmem>>, vector<32x32xbf16>
      tpu.vector_store %arg6[%c0_15, %c0_16], %18 {strides = array<i32>} : memref<32x32xbf16, #tpu.memory_space<vmem>>, vector<32x32xbf16>,
    } else {
    }
    return
  }
  func.func @transform_0(%arg0: i32, %arg1: i32, %arg2: i32) -> (i32, i32) {
    %c0_i32 = arith.constant 0 : i32
    return %arg0, %arg2 : i32, i32
  }
  func.func @transform_1(%arg0: i32, %arg1: i32, %arg2: i32) -> (i32, i32) {
    %c0_i32 = arith.constant 0 : i32
    return %arg2, %arg1 : i32, i32
  }
  func.func @transform_2(%arg0: i32, %arg1: i32, %arg2: i32) -> (i32, i32) {
    %c0_i32 = arith.constant 0 : i32
    %c0_i32_0 = arith.constant 0 : i32
    return %c0_i32, %arg1 : i32, i32
  }
  func.func @transform_3(%arg0: i32, %arg1: i32, %arg2: i32) -> (i32, i32) {
    %c0_i32 = arith.constant 0 : i32
    return %arg0, %arg1 : i32, i32
  }
}

module attributes {stable_mosaic.version = 11 : i64} {
  func.func @_mm_bias_act_kernel(%arg0: i32, %arg1: i32, %arg2: i32, %arg3: memref<2x32xbf16, #tpu.memory_space<vmem>>, %arg4: memref<32x16xbf16, #tpu.memory_space<vmem>>, %arg5: memref<1x16xf32, #tpu.memory_space<vmem>>, %arg6: memref<2x16xf32, #tpu.memory_space<vmem>>, %arg7: memref<2x16xf32, #tpu.memory_space<vmem>>) attributes {dimension_semantics = [#tpu.dimension_semantics<parallel>, #tpu.dimension_semantics<parallel>, #tpu.dimension_semantics<arbitrary>], iteration_bounds = array<i64: 1, 1, 1>, scalar_prefetch = 0 : i64, scratch_operands = 1 : i64, tpu.core_type = #tpu.core_type<tc>, window_params = [{transform_indices = @transform_0, window_bounds = array<i64: 2, 32>}, {transform_indices = @transform_1, window_bounds = array<i64: 32, 16>}, {transform_indices = @transform_2, window_bounds = array<i64: 1, 16>}, {transform_indices = @transform_3, window_bounds = array<i64: 2, 16>}]} {
    %c0_i32 = arith.constant 0 : i32
    %0 = arith.cmpi eq, %arg2, %c0_i32 : i32
    %1 = arith.extui %0 : i1 to i32
    %c0_i32_0 = arith.constant 0 : i32
    %2 = arith.cmpi ne, %1, %c0_i32_0 : i32
    scf.if %2 {
      %cst_10 = arith.constant 0.000000e+00 : f32
      %12 = vector.broadcast %cst_10 : f32 to vector<2x16xf32>
      %c0_11 = arith.constant 0 : index
      %c0_12 = arith.constant 0 : index
      %13 = vector.load %arg7[%c0_11, %c0_12] : memref<2x16xf32, #tpu.memory_space<vmem>>, vector<2x16xf32>
      tpu.vector_store %arg7[%c0_11, %c0_12], %12 {strides = array<i32>} : memref<2x16xf32, #tpu.memory_space<vmem>>, vector<2x16xf32>,
    } else {
    }
    %c0 = arith.constant 0 : index
    %c0_1 = arith.constant 0 : index
    %3 = vector.load %arg7[%c0, %c0_1] : memref<2x16xf32, #tpu.memory_space<vmem>>, vector<2x16xf32>
    %c0_2 = arith.constant 0 : index
    %c0_3 = arith.constant 0 : index
    %4 = vector.load %arg3[%c0_2, %c0_3] : memref<2x32xbf16, #tpu.memory_space<vmem>>, vector<2x32xbf16>
    %c0_4 = arith.constant 0 : index
    %c0_5 = arith.constant 0 : index
    %5 = vector.load %arg4[%c0_4, %c0_5] : memref<32x16xbf16, #tpu.memory_space<vmem>>, vector<32x16xbf16>
    %cst = arith.constant dense<0.000000e+00> : vector<2x16xf32>
    %6 = tpu.matmul %4, %5, %cst {dimension_numbers = #tpu.dot_dimension_numbers<[1], [0], [0], [1], [0, 0, 1, 1], [], []>} : vector<2x32xbf16>, vector<32x16xbf16>, vector<2x16xf32> -> vector<2x16xf32>
    %7 = arith.addf %3, %6 : vector<2x16xf32>
    %c0_6 = arith.constant 0 : index
    %c0_7 = arith.constant 0 : index
    %8 = vector.load %arg7[%c0_6, %c0_7] : memref<2x16xf32, #tpu.memory_space<vmem>>, vector<2x16xf32>
    tpu.vector_store %arg7[%c0_6, %c0_7], %7 {strides = array<i32>} : memref<2x16xf32, #tpu.memory_space<vmem>>, vector<2x16xf32>,
    %c0_i32_8 = arith.constant 0 : i32
    %9 = arith.cmpi eq, %arg2, %c0_i32_8 : i32
    %10 = arith.extui %9 : i1 to i32
    %c0_i32_9 = arith.constant 0 : i32
    %11 = arith.cmpi ne, %10, %c0_i32_9 : i32
    scf.if %11 {
      %c0_10 = arith.constant 0 : index
      %c0_11 = arith.constant 0 : index
      %12 = vector.load %arg7[%c0_10, %c0_11] : memref<2x16xf32, #tpu.memory_space<vmem>>, vector<2x16xf32>
      %c0_12 = arith.constant 0 : index
      %c0_13 = arith.constant 0 : index
      %13 = vector.load %arg5[%c0_12, %c0_13] : memref<1x16xf32, #tpu.memory_space<vmem>>, vector<1x16xf32>
      %14 = vector.broadcast %13 : vector<1x16xf32> to vector<2x16xf32>
      %15 = arith.addf %12, %14 : vector<2x16xf32>
      %cst_14 = arith.constant 0.000000e+00 : f32
      %16 = vector.broadcast %cst_14 : f32 to vector<2x16xf32>
      %17 = arith.maximumf %15, %16 : vector<2x16xf32>
      %c0_15 = arith.constant 0 : index
      %c0_16 = arith.constant 0 : index
      %18 = vector.load %arg6[%c0_15, %c0_16] : memref<2x16xf32, #tpu.memory_space<vmem>>, vector<2x16xf32>
      tpu.vector_store %arg6[%c0_15, %c0_16], %17 {strides = array<i32>} : memref<2x16xf32, #tpu.memory_space<vmem>>, vector<2x16xf32>,
    } else {
    }
    return
  }
  func.func @transform_0(%arg0: i32, %arg1: i32, %arg2: i32) -> (i32, i32) {
    %c0_i32 = arith.constant 0 : i32
    return %arg0, %arg2 : i32, i32
  }
  func.func @transform_1(%arg0: i32, %arg1: i32, %arg2: i32) -> (i32, i32) {
    %c0_i32 = arith.constant 0 : i32
    return %arg2, %arg1 : i32, i32
  }
  func.func @transform_2(%arg0: i32, %arg1: i32, %arg2: i32) -> (i32, i32) {
    %c0_i32 = arith.constant 0 : i32
    %c0_i32_0 = arith.constant 0 : i32
    return %c0_i32, %arg1 : i32, i32
  }
  func.func @transform_3(%arg0: i32, %arg1: i32, %arg2: i32) -> (i32, i32) {
    %c0_i32 = arith.constant 0 : i32
    return %arg0, %arg1 : i32, i32
  }
}

module attributes {stable_mosaic.version = 11 : i64} {
  func.func @_mm_bias_act_kernel(%arg0: i32, %arg1: i32, %arg2: i32, %arg3: memref<16x4xbf16, #tpu.memory_space<vmem>>, %arg4: memref<4x40xbf16, #tpu.memory_space<vmem>>, %arg5: memref<1x40xf32, #tpu.memory_space<vmem>>, %arg6: memref<16x40xf32, #tpu.memory_space<vmem>>, %arg7: memref<16x40xf32, #tpu.memory_space<vmem>>) attributes {dimension_semantics = [#tpu.dimension_semantics<parallel>, #tpu.dimension_semantics<parallel>, #tpu.dimension_semantics<arbitrary>], iteration_bounds = array<i64: 1, 1, 1>, scalar_prefetch = 0 : i64, scratch_operands = 1 : i64, tpu.core_type = #tpu.core_type<tc>, window_params = [{transform_indices = @transform_0, window_bounds = array<i64: 16, 4>}, {transform_indices = @transform_1, window_bounds = array<i64: 4, 40>}, {transform_indices = @transform_2, window_bounds = array<i64: 1, 40>}, {transform_indices = @transform_3, window_bounds = array<i64: 16, 40>}]} {
    %c0_i32 = arith.constant 0 : i32
    %0 = arith.cmpi eq, %arg2, %c0_i32 : i32
    %1 = arith.extui %0 : i1 to i32
    %c0_i32_0 = arith.constant 0 : i32
    %2 = arith.cmpi ne, %1, %c0_i32_0 : i32
    scf.if %2 {
      %cst_10 = arith.constant 0.000000e+00 : f32
      %12 = vector.broadcast %cst_10 : f32 to vector<16x40xf32>
      %c0_11 = arith.constant 0 : index
      %c0_12 = arith.constant 0 : index
      %13 = vector.load %arg7[%c0_11, %c0_12] : memref<16x40xf32, #tpu.memory_space<vmem>>, vector<16x40xf32>
      tpu.vector_store %arg7[%c0_11, %c0_12], %12 {strides = array<i32>} : memref<16x40xf32, #tpu.memory_space<vmem>>, vector<16x40xf32>,
    } else {
    }
    %c0 = arith.constant 0 : index
    %c0_1 = arith.constant 0 : index
    %3 = vector.load %arg7[%c0, %c0_1] : memref<16x40xf32, #tpu.memory_space<vmem>>, vector<16x40xf32>
    %c0_2 = arith.constant 0 : index
    %c0_3 = arith.constant 0 : index
    %4 = vector.load %arg3[%c0_2, %c0_3] : memref<16x4xbf16, #tpu.memory_space<vmem>>, vector<16x4xbf16>
    %c0_4 = arith.constant 0 : index
    %c0_5 = arith.constant 0 : index
    %5 = vector.load %arg4[%c0_4, %c0_5] : memref<4x40xbf16, #tpu.memory_space<vmem>>, vector<4x40xbf16>
    %cst = arith.constant dense<0.000000e+00> : vector<16x40xf32>
    %6 = tpu.matmul %4, %5, %cst {dimension_numbers = #tpu.dot_dimension_numbers<[1], [0], [0], [1], [0, 0, 1, 1], [], []>} : vector<16x4xbf16>, vector<4x40xbf16>, vector<16x40xf32> -> vector<16x40xf32>
    %7 = arith.addf %3, %6 : vector<16x40xf32>
    %c0_6 = arith.constant 0 : index
    %c0_7 = arith.constant 0 : index
    %8 = vector.load %arg7[%c0_6, %c0_7] : memref<16x40xf32, #tpu.memory_space<vmem>>, vector<16x40xf32>
    tpu.vector_store %arg7[%c0_6, %c0_7], %7 {strides = array<i32>} : memref<16x40xf32, #tpu.memory_space<vmem>>, vector<16x40xf32>,
    %c0_i32_8 = arith.constant 0 : i32
    %9 = arith.cmpi eq, %arg2, %c0_i32_8 : i32
    %10 = arith.extui %9 : i1 to i32
    %c0_i32_9 = arith.constant 0 : i32
    %11 = arith.cmpi ne, %10, %c0_i32_9 : i32
    scf.if %11 {
      %c0_10 = arith.constant 0 : index
      %c0_11 = arith.constant 0 : index
      %12 = vector.load %arg7[%c0_10, %c0_11] : memref<16x40xf32, #tpu.memory_space<vmem>>, vector<16x40xf32>
      %c0_12 = arith.constant 0 : index
      %c0_13 = arith.constant 0 : index
      %13 = vector.load %arg5[%c0_12, %c0_13] : memref<1x40xf32, #tpu.memory_space<vmem>>, vector<1x40xf32>
      %14 = vector.broadcast %13 : vector<1x40xf32> to vector<16x40xf32>
      %15 = arith.addf %12, %14 : vector<16x40xf32>
      %c0_14 = arith.constant 0 : index
      %c0_15 = arith.constant 0 : index
      %16 = vector.load %arg6[%c0_14, %c0_15] : memref<16x40xf32, #tpu.memory_space<vmem>>, vector<16x40xf32>
      tpu.vector_store %arg6[%c0_14, %c0_15], %15 {strides = array<i32>} : memref<16x40xf32, #tpu.memory_space<vmem>>, vector<16x40xf32>,
    } else {
    }
    return
  }
  func.func @transform_0(%arg0: i32, %arg1: i32, %arg2: i32) -> (i32, i32) {
    %c0_i32 = arith.constant 0 : i32
    return %arg0, %arg2 : i32, i32
  }
  func.func @transform_1(%arg0: i32, %arg1: i32, %arg2: i32) -> (i32, i32) {
    %c0_i32 = arith.constant 0 : i32
    return %arg2, %arg1 : i32, i32
  }
  func.func @transform_2(%arg0: i32, %arg1: i32, %arg2: i32) -> (i32, i32) {
    %c0_i32 = arith.constant 0 : i32
    %c0_i32_0 = arith.constant 0 : i32
    return %c0_i32, %arg1 : i32, i32
  }
  func.func @transform_3(%arg0: i32, %arg1: i32, %arg2: i32) -> (i32, i32) {
    %c0_i32 = arith.constant 0 : i32
    return %arg0, %arg1 : i32, i32
  }
}

module attributes {stable_mosaic.version = 11 : i64} {
  func.func @_mm_bias_act_kernel(%arg0: i32, %arg1: i32, %arg2: i32, %arg3: memref<160x4xbf16, #tpu.memory_space<vmem>>, %arg4: memref<4x16xbf16, #tpu.memory_space<vmem>>, %arg5: memref<1x16xf32, #tpu.memory_space<vmem>>, %arg6: memref<160x16xf32, #tpu.memory_space<vmem>>, %arg7: memref<160x16xf32, #tpu.memory_space<vmem>>) attributes {dimension_semantics = [#tpu.dimension_semantics<parallel>, #tpu.dimension_semantics<parallel>, #tpu.dimension_semantics<arbitrary>], iteration_bounds = array<i64: 1, 1, 1>, scalar_prefetch = 0 : i64, scratch_operands = 1 : i64, tpu.core_type = #tpu.core_type<tc>, window_params = [{transform_indices = @transform_0, window_bounds = array<i64: 160, 4>}, {transform_indices = @transform_1, window_bounds = array<i64: 4, 16>}, {transform_indices = @transform_2, window_bounds = array<i64: 1, 16>}, {transform_indices = @transform_3, window_bounds = array<i64: 160, 16>}]} {
    %c0_i32 = arith.constant 0 : i32
    %0 = arith.cmpi eq, %arg2, %c0_i32 : i32
    %1 = arith.extui %0 : i1 to i32
    %c0_i32_0 = arith.constant 0 : i32
    %2 = arith.cmpi ne, %1, %c0_i32_0 : i32
    scf.if %2 {
      %cst_10 = arith.constant 0.000000e+00 : f32
      %12 = vector.broadcast %cst_10 : f32 to vector<160x16xf32>
      %c0_11 = arith.constant 0 : index
      %c0_12 = arith.constant 0 : index
      %13 = vector.load %arg7[%c0_11, %c0_12] : memref<160x16xf32, #tpu.memory_space<vmem>>, vector<160x16xf32>
      tpu.vector_store %arg7[%c0_11, %c0_12], %12 {strides = array<i32>} : memref<160x16xf32, #tpu.memory_space<vmem>>, vector<160x16xf32>,
    } else {
    }
    %c0 = arith.constant 0 : index
    %c0_1 = arith.constant 0 : index
    %3 = vector.load %arg7[%c0, %c0_1] : memref<160x16xf32, #tpu.memory_space<vmem>>, vector<160x16xf32>
    %c0_2 = arith.constant 0 : index
    %c0_3 = arith.constant 0 : index
    %4 = vector.load %arg3[%c0_2, %c0_3] : memref<160x4xbf16, #tpu.memory_space<vmem>>, vector<160x4xbf16>
    %c0_4 = arith.constant 0 : index
    %c0_5 = arith.constant 0 : index
    %5 = vector.load %arg4[%c0_4, %c0_5] : memref<4x16xbf16, #tpu.memory_space<vmem>>, vector<4x16xbf16>
    %cst = arith.constant dense<0.000000e+00> : vector<160x16xf32>
    %6 = tpu.matmul %4, %5, %cst {dimension_numbers = #tpu.dot_dimension_numbers<[1], [0], [0], [1], [0, 0, 1, 1], [], []>} : vector<160x4xbf16>, vector<4x16xbf16>, vector<160x16xf32> -> vector<160x16xf32>
    %7 = arith.addf %3, %6 : vector<160x16xf32>
    %c0_6 = arith.constant 0 : index
    %c0_7 = arith.constant 0 : index
    %8 = vector.load %arg7[%c0_6, %c0_7] : memref<160x16xf32, #tpu.memory_space<vmem>>, vector<160x16xf32>
    tpu.vector_store %arg7[%c0_6, %c0_7], %7 {strides = array<i32>} : memref<160x16xf32, #tpu.memory_space<vmem>>, vector<160x16xf32>,
    %c0_i32_8 = arith.constant 0 : i32
    %9 = arith.cmpi eq, %arg2, %c0_i32_8 : i32
    %10 = arith.extui %9 : i1 to i32
    %c0_i32_9 = arith.constant 0 : i32
    %11 = arith.cmpi ne, %10, %c0_i32_9 : i32
    scf.if %11 {
      %c0_10 = arith.constant 0 : index
      %c0_11 = arith.constant 0 : index
      %12 = vector.load %arg7[%c0_10, %c0_11] : memref<160x16xf32, #tpu.memory_space<vmem>>, vector<160x16xf32>
      %c0_12 = arith.constant 0 : index
      %c0_13 = arith.constant 0 : index
      %13 = vector.load %arg5[%c0_12, %c0_13] : memref<1x16xf32, #tpu.memory_space<vmem>>, vector<1x16xf32>
      %14 = vector.broadcast %13 : vector<1x16xf32> to vector<160x16xf32>
      %15 = arith.addf %12, %14 : vector<160x16xf32>
      %c0_14 = arith.constant 0 : index
      %c0_15 = arith.constant 0 : index
      %16 = vector.load %arg6[%c0_14, %c0_15] : memref<160x16xf32, #tpu.memory_space<vmem>>, vector<160x16xf32>
      tpu.vector_store %arg6[%c0_14, %c0_15], %15 {strides = array<i32>} : memref<160x16xf32, #tpu.memory_space<vmem>>, vector<160x16xf32>,
    } else {
    }
    return
  }
  func.func @transform_0(%arg0: i32, %arg1: i32, %arg2: i32) -> (i32, i32) {
    %c0_i32 = arith.constant 0 : i32
    return %arg0, %arg2 : i32, i32
  }
  func.func @transform_1(%arg0: i32, %arg1: i32, %arg2: i32) -> (i32, i32) {
    %c0_i32 = arith.constant 0 : i32
    return %arg2, %arg1 : i32, i32
  }
  func.func @transform_2(%arg0: i32, %arg1: i32, %arg2: i32) -> (i32, i32) {
    %c0_i32 = arith.constant 0 : i32
    %c0_i32_0 = arith.constant 0 : i32
    return %c0_i32, %arg1 : i32, i32
  }
  func.func @transform_3(%arg0: i32, %arg1: i32, %arg2: i32) -> (i32, i32) {
    %c0_i32 = arith.constant 0 : i32
    return %arg0, %arg1 : i32, i32
  }
}

</mosaic_0001>

<llo_original>
// kernel: single_task_model_forward.7
$region0: #{single_task_model_forward.7}
  #allocation0 [shape = 'u32[]', space=smem, size = 0x4, offset = 0x4, fixed_abs, tag = 'smem constant byte address 0x4 - core index']
  #allocation1 [shape = 'u32[144,128]{1,0:T(1,128)}', space=vmem, size = 0x12000, scoped, tag = 'internal scratch']
  #allocation2 [shape = 'f32[128,16]{1,0:T(8,128)}', space=vmem, size = 0x10000, scoped, tag = 'scratch operand']
  %s0 = inlined_call_operand.vmem [shape: bf16[128,36], index: 0, kind: input, shape index: {}]
  %s1 = inlined_call_operand.vmem [shape: bf16[36,16], index: 1, kind: input, shape index: {}]
  %s2 = inlined_call_operand.vmem [shape: f32[1,16], index: 2, kind: input, shape index: {}]
  %s3 = inlined_call_operand.vmem [shape: bf16[128,16], index: 3, kind: output, shape index: {}]
  %s4 = sld [smem:[#allocation0]]
  $region30: #{single_task_model_forward.7} parent=0
    _
  %s6 = ssub.s32 1, %s4
  %s7 = scalar_select 0, %s6, %s4
  // Predicated region
  $region2: #{single_task_model_forward.7} parent=0 // pred_check
    _
  $region3: #{single_task_model_forward.7} parent=0 // pred_check_branch
    %9 = sbr.rel (0) target = $region5
  $region4: #{single_task_model_forward.7} parent=0 // pred_region
    _
  $region5: #{single_task_model_forward.7} parent=0 // pred_fallthru
    _
  // Predicated region
  $region6: #{single_task_model_forward.7} parent=0 // pred_check
    _
  $region7: #{single_task_model_forward.7} parent=0 // pred_check_branch
    %11 = sbr.rel (0) target = $region9
  $region8: #{single_task_model_forward.7} parent=0 // pred_region
    _
  $region9: #{single_task_model_forward.7} parent=0 // pred_fallthru
    _
  // Predicated region
  $region10: #{single_task_model_forward.7} parent=0 // pred_check
    _
  $region11: #{single_task_model_forward.7} parent=0 // pred_check_branch
    %13 = sbr.rel (0) target = $region13
  $region12: #{single_task_model_forward.7} parent=0 // pred_region
    _
  $region13: #{single_task_model_forward.7} parent=0 // pred_fallthru
    _
  %p15 = scmp.eq.s32.totalorder 0, 0
  // Predicated region
  $region14: #{single_task_model_forward.7} parent=0 // pred_check
    %p16 = pneg %p15
  $region15: #{single_task_model_forward.7} parent=0 // pred_check_branch
    %18 = sbr.rel (%p16) target = $region17
  $region16: #{single_task_model_forward.7} parent=0 // pred_region
    %vm19 = vcmask 130048
    %20 = vst.msk [vmem:[#allocation2] sm:$0xff] %vm19, 0.0
    %21 = vst.msk [vmem:[#allocation2 + $0x8] sm:$0xff] %vm19, 0.0
    %22 = vst.msk [vmem:[#allocation2 + $0x10] sm:$0xff] %vm19, 0.0
    %23 = vst.msk [vmem:[#allocation2 + $0x18] sm:$0xff] %vm19, 0.0
    %24 = vst.msk [vmem:[#allocation2 + $0x20] sm:$0xff] %vm19, 0.0
    %25 = vst.msk [vmem:[#allocation2 + $0x28] sm:$0xff] %vm19, 0.0
    %26 = vst.msk [vmem:[#allocation2 + $0x30] sm:$0xff] %vm19, 0.0
    %27 = vst.msk [vmem:[#allocation2 + $0x38] sm:$0xff] %vm19, 0.0
    %28 = vst.msk [vmem:[#allocation2 + $0x40] sm:$0xff] %vm19, 0.0
    %29 = vst.msk [vmem:[#allocation2 + $0x48] sm:$0xff] %vm19, 0.0
    %30 = vst.msk [vmem:[#allocation2 + $0x50] sm:$0xff] %vm19, 0.0
    %31 = vst.msk [vmem:[#allocation2 + $0x58] sm:$0xff] %vm19, 0.0
    %32 = vst.msk [vmem:[#allocation2 + $0x60] sm:$0xff] %vm19, 0.0
    %33 = vst.msk [vmem:[#allocation2 + $0x68] sm:$0xff] %vm19, 0.0
    %34 = vst.msk [vmem:[#allocation2 + $0x70] sm:$0xff] %vm19, 0.0
    %35 = vst.msk [vmem:[#allocation2 + $0x78] sm:$0xff] %vm19, 0.0
  $region17: #{single_task_model_forward.7} parent=0 // pred_fallthru
    _
  %v36 = vld [vmem:[#allocation2] sm:$0xff]
  %v37 = vld [vmem:[#allocation2 + $0x8] sm:$0xff]
  %v38 = vld [vmem:[#allocation2 + $0x10] sm:$0xff]
  %v39 = vld [vmem:[#allocation2 + $0x18] sm:$0xff]
  %v40 = vld [vmem:[#allocation2 + $0x20] sm:$0xff]
  %v41 = vld [vmem:[#allocation2 + $0x28] sm:$0xff]
  %v42 = vld [vmem:[#allocation2 + $0x30] sm:$0xff]
  %v43 = vld [vmem:[#allocation2 + $0x38] sm:$0xff]
  %v44 = vld [vmem:[#allocation2 + $0x40] sm:$0xff]
  %v45 = vld [vmem:[#allocation2 + $0x48] sm:$0xff]
  %v46 = vld [vmem:[#allocation2 + $0x50] sm:$0xff]
  %v47 = vld [vmem:[#allocation2 + $0x58] sm:$0xff]
  %v48 = vld [vmem:[#allocation2 + $0x60] sm:$0xff]
  %v49 = vld [vmem:[#allocation2 + $0x68] sm:$0xff]
  %v50 = vld [vmem:[#allocation2 + $0x70] sm:$0xff]
  %v51 = vld [vmem:[#allocation2 + $0x78] sm:$0xff]
  %v52 = vld [vmem:[%s0] sm:$0xf]
  %v53 = vld [vmem:[%s0 + $0x4] sm:$0xf]
  %v54 = vld [vmem:[%s0 + $0x8] sm:$0xf]
  %v55 = vld [vmem:[%s0 + $0xc] sm:$0xf]
  %v56 = vld [vmem:[%s0 + $0x10] sm:$0xf]
  %v57 = vld [vmem:[%s0 + $0x14] sm:$0xf]
  %v58 = vld [vmem:[%s0 + $0x18] sm:$0xf]
  %v59 = vld [vmem:[%s0 + $0x1c] sm:$0xf]
  %v60 = vld [vmem:[%s0 + $0x20] sm:$0xf]
  %v61 = vld [vmem:[%s0 + $0x24] sm:$0xf]
  %v62 = vld [vmem:[%s0 + $0x28] sm:$0xf]
  %v63 = vld [vmem:[%s0 + $0x2c] sm:$0xf]
  %v64 = vld [vmem:[%s0 + $0x30] sm:$0xf]
  %v65 = vld [vmem:[%s0 + $0x34] sm:$0xf]
  %v66 = vld [vmem:[%s0 + $0x38] sm:$0xf]
  %v67 = vld [vmem:[%s0 + $0x3c] sm:$0xf]
  %v68 = vld [vmem:[%s1] sm:$0xf]
  %v69 = vld [vmem:[%s1 + $0x4] sm:$0xf]
  %v70 = vld [vmem:[%s1 + $0x8] sm:$0xf]
  %v71 = vld [vmem:[%s1 + $0xc] sm:$0xf]
  %v72 = vld [vmem:[%s1 + $0x10] sm:$0x3]
  %v89 = vunpack.c.l.b16 %v52
  %v90 = vunpack.c.l.b16 %v53
  %v91 = vunpack.c.l.b16 %v54
  %v92 = vunpack.c.l.b16 %v55
  %v93 = vunpack.c.l.b16 %v56
  %v94 = vunpack.c.l.b16 %v57
  %v95 = vunpack.c.l.b16 %v58
  %v96 = vunpack.c.l.b16 %v59
  %v97 = vunpack.c.l.b16 %v60
  %v98 = vunpack.c.l.b16 %v61
  %v99 = vunpack.c.l.b16 %v62
  %v100 = vunpack.c.l.b16 %v63
  %v101 = vunpack.c.l.b16 %v64
  %v102 = vunpack.c.l.b16 %v65
  %v103 = vunpack.c.l.b16 %v66
  %v104 = vunpack.c.l.b16 %v67
  %v105 = vpack.c.b16 %v90, %v89
  %v106 = vpack.c.b16 %v92, %v91
  %v107 = vpack.c.b16 %v94, %v93
  %v108 = vpack.c.b16 %v96, %v95
  %v109 = vpack.c.b16 %v98, %v97
  %v110 = vpack.c.b16 %v100, %v99
  %v111 = vpack.c.b16 %v102, %v101
  %v112 = vpack.c.b16 %v104, %v103
  %v118 = vunpack.c.l.b16 %v68
  %v119 = vunpack.c.l.b16 %v69
  %v120 = vunpack.c.l.b16 %v70
  %v121 = vunpack.c.l.b16 %v71
  %v122 = vunpack.c.l.b16 %v72
  %v123 = vpack.c.b16 %v119, %v118
  %v124 = vpack.c.b16 %v121, %v120
  %v125 = vpack.c.b16 %v122, %v122
  %vm128 = vcmask 293888
  %v130 = vsel %vm128, %v105, 0
  %v133 = vsel %vm128, %v106, 0
  %v136 = vsel %vm128, %v107, 0
  %v139 = vsel %vm128, %v108, 0
  %v142 = vsel %vm128, %v109, 0
  %v145 = vsel %vm128, %v110, 0
  %v148 = vsel %vm128, %v111, 0
  %v151 = vsel %vm128, %v112, 0
  %vm153 = vcmask 1041408
  %v155 = vsel %vm153, %v125, 0
  %157 = vmatprep.subr.bf16.mxu0 0
  %158 = vmatpush1.bf16.msra.mxu0 0
  %159 = vmatprep.subr.bf16.mxu0 0
  %160 = vmatpush1.bf16.msra.mxu0 0
  %161 = vmatprep.subr.bf16.mxu0 0
  %162 = vmatpush1.bf16.msra.mxu0 0
  %163 = vmatprep.subr.bf16.mxu0 0
  %164 = vmatpush1.bf16.msra.mxu0 0
  %165 = vmatprep.subr.bf16.mxu0 0
  %166 = vmatpush1.bf16.msra.mxu0 0
  %167 = vmatprep.subr.bf16.mxu0 0
  %168 = vmatpush1.bf16.msra.mxu0 %v155
  %169 = vmatprep.subr.bf16.mxu0 0
  %170 = vmatpush1.bf16.msra.mxu0 %v124
  %171 = vmatprep.subr.bf16.mxu0 0
  %172 = vmatpush1.bf16.msra.mxu0 %v123
  %173 = vmatprep.subr.bf16.mxu0 0
  %174 = vmatpush2.bf16.msra.mxu0 0
  %175 = vmatprep.subr.bf16.mxu0 0
  %176 = vmatpush2.bf16.msra.mxu0 0
  %177 = vmatprep.subr.bf16.mxu0 0
  %178 = vmatpush2.bf16.msra.mxu0 0
  %179 = vmatprep.subr.bf16.mxu0 0
  %180 = vmatpush2.bf16.msra.mxu0 0
  %181 = vmatprep.subr.bf16.mxu0 0
  %182 = vmatpush2.bf16.msra.mxu0 0
  %183 = vmatprep.subr.bf16.mxu0 0
  %184 = vmatpush2.bf16.msra.mxu0 0
  %185 = vmatprep.subr.bf16.mxu0 0
  %186 = vmatpush2.bf16.msra.mxu0 0
  %187 = vmatprep.subr.bf16.mxu0 0
  %188 = vmatpush2.bf16.msra.mxu0 0
  %189 = vmatprep.mubr.bf16.mxu0 0
  %190 = vmatmul.mubr.bf16.gmra.mxu0 %v130
  %v191 = vpop.f32.mrf.mxu0
  %v192 = vadd.f32 0.0, %v191
  %v193 = vpop.f32.mrf.mxu0
  %v194 = vpop.f32.mrf.mxu0
  %v195 = vadd.f32 0.0, %v194
  %v196 = vpop.f32.mrf.mxu0
  %197 = vmatprep.mubr.bf16.mxu0 0
  %198 = vmatmul.mubr.bf16.gmra.mxu0 %v133
  %v199 = vpop.f32.mrf.mxu0
  %v200 = vadd.f32 0.0, %v199
  %v201 = vpop.f32.mrf.mxu0
  %v202 = vpop.f32.mrf.mxu0
  %v203 = vadd.f32 0.0, %v202
  %v204 = vpop.f32.mrf.mxu0
  %205 = vmatprep.mubr.bf16.mxu0 0
  %206 = vmatmul.mubr.bf16.gmra.mxu0 %v136
  %v207 = vpop.f32.mrf.mxu0
  %v208 = vadd.f32 0.0, %v207
  %v209 = vpop.f32.mrf.mxu0
  %v210 = vpop.f32.mrf.mxu0
  %v211 = vadd.f32 0.0, %v210
  %v212 = vpop.f32.mrf.mxu0
  %213 = vmatprep.mubr.bf16.mxu0 0
  %214 = vmatmul.mubr.bf16.gmra.mxu0 %v139
  %v215 = vpop.f32.mrf.mxu0
  %v216 = vadd.f32 0.0, %v215
  %v217 = vpop.f32.mrf.mxu0
  %v218 = vpop.f32.mrf.mxu0
  %v219 = vadd.f32 0.0, %v218
  %v220 = vpop.f32.mrf.mxu0
  %221 = vmatprep.mubr.bf16.mxu0 0
  %222 = vmatmul.mubr.bf16.gmra.mxu0 %v142
  %v223 = vpop.f32.mrf.mxu0
  %v224 = vadd.f32 0.0, %v223
  %v225 = vpop.f32.mrf.mxu0
  %v226 = vpop.f32.mrf.mxu0
  %v227 = vadd.f32 0.0, %v226
  %v228 = vpop.f32.mrf.mxu0
  %229 = vmatprep.mubr.bf16.mxu0 0
  %230 = vmatmul.mubr.bf16.gmra.mxu0 %v145
  %v231 = vpop.f32.mrf.mxu0
  %v232 = vadd.f32 0.0, %v231
  %v233 = vpop.f32.mrf.mxu0
  %v234 = vpop.f32.mrf.mxu0
  %v235 = vadd.f32 0.0, %v234
  %v236 = vpop.f32.mrf.mxu0
  %237 = vmatprep.mubr.bf16.mxu0 0
  %238 = vmatmul.mubr.bf16.gmra.mxu0 %v148
  %v239 = vpop.f32.mrf.mxu0
  %v240 = vadd.f32 0.0, %v239
  %v241 = vpop.f32.mrf.mxu0
  %v242 = vpop.f32.mrf.mxu0
  %v243 = vadd.f32 0.0, %v242
  %v244 = vpop.f32.mrf.mxu0
  %245 = vmatprep.mubr.bf16.mxu0 0
  %246 = vmatmul.mubr.bf16.gmra.mxu0 %v151
  %v247 = vpop.f32.mrf.mxu0
  %v248 = vadd.f32 0.0, %v247
  %v249 = vpop.f32.mrf.mxu0
  %v250 = vpop.f32.mrf.mxu0
  %v251 = vadd.f32 0.0, %v250
  %v252 = vpop.f32.mrf.mxu0
  %253 = vdwg.mxu0
  %v254 = vadd.f32 %v36, %v192
  %v255 = vadd.f32 %v37, %v195
  %v256 = vadd.f32 %v38, %v200
  %v257 = vadd.f32 %v39, %v203
  %v258 = vadd.f32 %v40, %v208
  %v259 = vadd.f32 %v41, %v211
  %v260 = vadd.f32 %v42, %v216
  %v261 = vadd.f32 %v43, %v219
  %v262 = vadd.f32 %v44, %v224
  %v263 = vadd.f32 %v45, %v227
  %v264 = vadd.f32 %v46, %v232
  %v265 = vadd.f32 %v47, %v235
  %v266 = vadd.f32 %v48, %v240
  %v267 = vadd.f32 %v49, %v243
  %v268 = vadd.f32 %v50, %v248
  %v269 = vadd.f32 %v51, %v251
  %vm270 = vcmask 130048
  %271 = vst.msk [vmem:[#allocation2] sm:$0xff] %vm270, %v254
  %272 = vst.msk [vmem:[#allocation2 + $0x8] sm:$0xff] %vm270, %v255
  %273 = vst.msk [vmem:[#allocation2 + $0x10] sm:$0xff] %vm270, %v256
  %274 = vst.msk [vmem:[#allocation2 + $0x18] sm:$0xff] %vm270, %v257
  %275 = vst.msk [vmem:[#allocation2 + $0x20] sm:$0xff] %vm270, %v258
  %276 = vst.msk [vmem:[#allocation2 + $0x28] sm:$0xff] %vm270, %v259
  %277 = vst.msk [vmem:[#allocation2 + $0x30] sm:$0xff] %vm270, %v260
  %278 = vst.msk [vmem:[#allocation2 + $0x38] sm:$0xff] %vm270, %v261
  %279 = vst.msk [vmem:[#allocation2 + $0x40] sm:$0xff] %vm270, %v262
  %280 = vst.msk [vmem:[#allocation2 + $0x48] sm:$0xff] %vm270, %v263
  %281 = vst.msk [vmem:[#allocation2 + $0x50] sm:$0xff] %vm270, %v264
  %282 = vst.msk [vmem:[#allocation2 + $0x58] sm:$0xff] %vm270, %v265
  %283 = vst.msk [vmem:[#allocation2 + $0x60] sm:$0xff] %vm270, %v266
  %284 = vst.msk [vmem:[#allocation2 + $0x68] sm:$0xff] %vm270, %v267
  %285 = vst.msk [vmem:[#allocation2 + $0x70] sm:$0xff] %vm270, %v268
  %286 = vst.msk [vmem:[#allocation2 + $0x78] sm:$0xff] %vm270, %v269
  // Predicated region
  $region18: #{single_task_model_forward.7} parent=0 // pred_check
    %p287 = pneg %p15
  $region19: #{single_task_model_forward.7} parent=0 // pred_check_branch
    %289 = sbr.rel (%p287) target = $region21
  $region20: #{single_task_model_forward.7} parent=0 // pred_region
    %v290 = vld [vmem:[#allocation2] sm:$0xff]
    %v291 = vld [vmem:[#allocation2 + $0x8] sm:$0xff]
    %v292 = vld [vmem:[#allocation2 + $0x10] sm:$0xff]
    %v293 = vld [vmem:[#allocation2 + $0x18] sm:$0xff]
    %v294 = vld [vmem:[#allocation2 + $0x20] sm:$0xff]
    %v295 = vld [vmem:[#allocation2 + $0x28] sm:$0xff]
    %v296 = vld [vmem:[#allocation2 + $0x30] sm:$0xff]
    %v297 = vld [vmem:[#allocation2 + $0x38] sm:$0xff]
    %v298 = vld [vmem:[#allocation2 + $0x40] sm:$0xff]
    %v299 = vld [vmem:[#allocation2 + $0x48] sm:$0xff]
    %v300 = vld [vmem:[#allocation2 + $0x50] sm:$0xff]
    %v301 = vld [vmem:[#allocation2 + $0x58] sm:$0xff]
    %v302 = vld [vmem:[#allocation2 + $0x60] sm:$0xff]
    %v303 = vld [vmem:[#allocation2 + $0x68] sm:$0xff]
    %v304 = vld [vmem:[#allocation2 + $0x70] sm:$0xff]
    %v305 = vld [vmem:[#allocation2 + $0x78] sm:$0xff]
    %v306 = vld [vmem:[%s2] sm:$0x1]
    %v308 = vlaneseq
    %v309 = vshrl.u32 %v308, 7
    %v310 = vsub.s32 0, %v309
    %v311 = vrot.slane %v306, %v310
    %v313 = vadd.f32 %v290, %v311
    %v314 = vadd.f32 %v291, %v311
    %v315 = vadd.f32 %v292, %v311
    %v316 = vadd.f32 %v293, %v311
    %v317 = vadd.f32 %v294, %v311
    %v318 = vadd.f32 %v295, %v311
    %v319 = vadd.f32 %v296, %v311
    %v320 = vadd.f32 %v297, %v311
    %v321 = vadd.f32 %v298, %v311
    %v322 = vadd.f32 %v299, %v311
    %v323 = vadd.f32 %v300, %v311
    %v324 = vadd.f32 %v301, %v311
    %v325 = vadd.f32 %v302, %v311
    %v326 = vadd.f32 %v303, %v311
    %v327 = vadd.f32 %v304, %v311
    %v328 = vadd.f32 %v305, %v311
    %v329 = vmax.f32 %v313, 0.0
    %v330 = vmax.f32 %v314, 0.0
    %v331 = vmax.f32 %v315, 0.0
    %v332 = vmax.f32 %v316, 0.0
    %v333 = vmax.f32 %v317, 0.0
    %v334 = vmax.f32 %v318, 0.0
    %v335 = vmax.f32 %v319, 0.0
    %v336 = vmax.f32 %v320, 0.0
    %v337 = vmax.f32 %v321, 0.0
    %v338 = vmax.f32 %v322, 0.0
    %v339 = vmax.f32 %v323, 0.0
    %v340 = vmax.f32 %v324, 0.0
    %v341 = vmax.f32 %v325, 0.0
    %v342 = vmax.f32 %v326, 0.0
    %v343 = vmax.f32 %v327, 0.0
    %v344 = vmax.f32 %v328, 0.0
    %v345 = vpack.c.bf16 %v330, %v329
    %v346 = vpack.c.bf16 %v332, %v331
    %v347 = vpack.c.bf16 %v334, %v333
    %v348 = vpack.c.bf16 %v336, %v335
    %v349 = vpack.c.bf16 %v338, %v337
    %v350 = vpack.c.bf16 %v340, %v339
    %v351 = vpack.c.bf16 %v342, %v341
    %v352 = vpack.c.bf16 %v344, %v343
    %v361 = vunpack.c.l.b16 %v345
    %v362 = vunpack.c.h.b16 %v345
    %v363 = vunpack.c.l.b16 %v346
    %v364 = vunpack.c.h.b16 %v346
    %v365 = vunpack.c.l.b16 %v347
    %v366 = vunpack.c.h.b16 %v347
    %v367 = vunpack.c.l.b16 %v348
    %v368 = vunpack.c.h.b16 %v348
    %v369 = vunpack.c.l.b16 %v349
    %v370 = vunpack.c.h.b16 %v349
    %v371 = vunpack.c.l.b16 %v350
    %v372 = vunpack.c.h.b16 %v350
    %v373 = vunpack.c.l.b16 %v351
    %v374 = vunpack.c.h.b16 %v351
    %v375 = vunpack.c.l.b16 %v352
    %v376 = vunpack.c.h.b16 %v352
    %v377 = vpack.c.b16 %v361, %v361
    %v378 = vpack.c.b16 %v362, %v362
    %v379 = vpack.c.b16 %v363, %v363
    %v380 = vpack.c.b16 %v364, %v364
    %v381 = vpack.c.b16 %v365, %v365
    %v382 = vpack.c.b16 %v366, %v366
    %v383 = vpack.c.b16 %v367, %v367
    %v384 = vpack.c.b16 %v368, %v368
    %v385 = vpack.c.b16 %v369, %v369
    %v386 = vpack.c.b16 %v370, %v370
    %v387 = vpack.c.b16 %v371, %v371
    %v388 = vpack.c.b16 %v372, %v372
    %v389 = vpack.c.b16 %v373, %v373
    %v390 = vpack.c.b16 %v374, %v374
    %v391 = vpack.c.b16 %v375, %v375
    %v392 = vpack.c.b16 %v376, %v376
    %vm409 = vcmask 125952
    %410 = vst.msk [vmem:[%s3] sm:$0xf] %vm409, %v377
    %411 = vst.msk [vmem:[%s3 + $0x4] sm:$0xf] %vm409, %v378
    %412 = vst.msk [vmem:[%s3 + $0x8] sm:$0xf] %vm409, %v379
    %413 = vst.msk [vmem:[%s3 + $0xc] sm:$0xf] %vm409, %v380
    %414 = vst.msk [vmem:[%s3 + $0x10] sm:$0xf] %vm409, %v381
    %415 = vst.msk [vmem:[%s3 + $0x14] sm:$0xf] %vm409, %v382
    %416 = vst.msk [vmem:[%s3 + $0x18] sm:$0xf] %vm409, %v383
    %417 = vst.msk [vmem:[%s3 + $0x1c] sm:$0xf] %vm409, %v384
    %418 = vst.msk [vmem:[%s3 + $0x20] sm:$0xf] %vm409, %v385
    %419 = vst.msk [vmem:[%s3 + $0x24] sm:$0xf] %vm409, %v386
    %420 = vst.msk [vmem:[%s3 + $0x28] sm:$0xf] %vm409, %v387
    %421 = vst.msk [vmem:[%s3 + $0x2c] sm:$0xf] %vm409, %v388
    %422 = vst.msk [vmem:[%s3 + $0x30] sm:$0xf] %vm409, %v389
    %423 = vst.msk [vmem:[%s3 + $0x34] sm:$0xf] %vm409, %v390
    %424 = vst.msk [vmem:[%s3 + $0x38] sm:$0xf] %vm409, %v391
    %425 = vst.msk [vmem:[%s3 + $0x3c] sm:$0xf] %vm409, %v392
  $region21: #{single_task_model_forward.7} parent=0 // pred_fallthru
    _
  // Predicated region
  $region22: #{single_task_model_forward.7} parent=0 // pred_check
    _
  $region23: #{single_task_model_forward.7} parent=0 // pred_check_branch
    %427 = sbr.rel (0) target = $region25
  $region24: #{single_task_model_forward.7} parent=0 // pred_region
    _
  $region25: #{single_task_model_forward.7} parent=0 // pred_fallthru
    _
  // Predicated region
  $region26: #{single_task_model_forward.7} parent=0 // pred_check
    _
  $region27: #{single_task_model_forward.7} parent=0 // pred_check_branch
    %429 = sbr.rel (0) target = $region29
  $region28: #{single_task_model_forward.7} parent=0 // pred_region
    _
  $region29: #{single_task_model_forward.7} parent=0 // pred_fallthru
    _

// kernel: single_task_model_forward.8
$region0: #{single_task_model_forward.8}
  #allocation0 [shape = 'u32[]', space=smem, size = 0x4, offset = 0x4, fixed_abs, tag = 'smem constant byte address 0x4 - core index']
  #allocation1 [shape = 'u32[144,128]{1,0:T(1,128)}', space=vmem, size = 0x12000, scoped, tag = 'internal scratch']
  #allocation2 [shape = 'f32[32,32]{1,0:T(8,128)}', space=vmem, size = 0x4000, scoped, tag = 'scratch operand']
  %s0 = inlined_call_operand.vmem [shape: bf16[32,144], index: 0, kind: input, shape index: {}]
  %s1 = inlined_call_operand.vmem [shape: bf16[144,32], index: 1, kind: input, shape index: {}]
  %s2 = inlined_call_operand.vmem [shape: f32[1,32], index: 2, kind: input, shape index: {}]
  %s3 = inlined_call_operand.vmem [shape: bf16[32,32], index: 3, kind: output, shape index: {}]
  %s4 = sld [smem:[#allocation0]]
  $region30: #{single_task_model_forward.8} parent=0
    _
  %s6 = ssub.s32 1, %s4
  %s7 = scalar_select 0, %s6, %s4
  // Predicated region
  $region2: #{single_task_model_forward.8} parent=0 // pred_check
    _
  $region3: #{single_task_model_forward.8} parent=0 // pred_check_branch
    %9 = sbr.rel (0) target = $region5
  $region4: #{single_task_model_forward.8} parent=0 // pred_region
    _
  $region5: #{single_task_model_forward.8} parent=0 // pred_fallthru
    _
  // Predicated region
  $region6: #{single_task_model_forward.8} parent=0 // pred_check
    _
  $region7: #{single_task_model_forward.8} parent=0 // pred_check_branch
    %11 = sbr.rel (0) target = $region9
  $region8: #{single_task_model_forward.8} parent=0 // pred_region
    _
  $region9: #{single_task_model_forward.8} parent=0 // pred_fallthru
    _
  // Predicated region
  $region10: #{single_task_model_forward.8} parent=0 // pred_check
    _
  $region11: #{single_task_model_forward.8} parent=0 // pred_check_branch
    %13 = sbr.rel (0) target = $region13
  $region12: #{single_task_model_forward.8} parent=0 // pred_region
    _
  $region13: #{single_task_model_forward.8} parent=0 // pred_fallthru
    _
  %p15 = scmp.eq.s32.totalorder 0, 0
  // Predicated region
  $region14: #{single_task_model_forward.8} parent=0 // pred_check
    %p16 = pneg %p15
  $region15: #{single_task_model_forward.8} parent=0 // pred_check_branch
    %18 = sbr.rel (%p16) target = $region17
  $region16: #{single_task_model_forward.8} parent=0 // pred_region
    %vm19 = vcmask 261120
    %20 = vst.msk [vmem:[#allocation2] sm:$0xff] %vm19, 0.0
    %21 = vst.msk [vmem:[#allocation2 + $0x8] sm:$0xff] %vm19, 0.0
    %22 = vst.msk [vmem:[#allocation2 + $0x10] sm:$0xff] %vm19, 0.0
    %23 = vst.msk [vmem:[#allocation2 + $0x18] sm:$0xff] %vm19, 0.0
  $region17: #{single_task_model_forward.8} parent=0 // pred_fallthru
    _
  %v24 = vld [vmem:[#allocation2] sm:$0xff]
  %v25 = vld [vmem:[#allocation2 + $0x8] sm:$0xff]
  %v26 = vld [vmem:[#allocation2 + $0x10] sm:$0xff]
  %v27 = vld [vmem:[#allocation2 + $0x18] sm:$0xff]
  %v28 = vld [vmem:[%s0] sm:$0xff]
  %v29 = vld [vmem:[%s0 + $0x8] sm:$0xff]
  %v30 = vld [vmem:[%s0 + $0x10] sm:$0xff]
  %v31 = vld [vmem:[%s0 + $0x18] sm:$0xff]
  %v32 = vld [vmem:[%s1] sm:$0xf]
  %v33 = vld [vmem:[%s1 + $0x4] sm:$0xf]
  %v34 = vld [vmem:[%s1 + $0x8] sm:$0xf]
  %v35 = vld [vmem:[%s1 + $0xc] sm:$0xf]
  %v36 = vld [vmem:[%s1 + $0x10] sm:$0xf]
  %v37 = vld [vmem:[%s1 + $0x14] sm:$0xf]
  %v38 = vld [vmem:[%s1 + $0x18] sm:$0xf]
  %v39 = vld [vmem:[%s1 + $0x1c] sm:$0xf]
  %v40 = vld [vmem:[%s1 + $0x20] sm:$0xf]
  %v41 = vld [vmem:[%s1 + $0x24] sm:$0xf]
  %v42 = vld [vmem:[%s1 + $0x28] sm:$0xf]
  %v43 = vld [vmem:[%s1 + $0x2c] sm:$0xf]
  %v44 = vld [vmem:[%s1 + $0x30] sm:$0xf]
  %v45 = vld [vmem:[%s1 + $0x34] sm:$0xf]
  %v46 = vld [vmem:[%s1 + $0x38] sm:$0xf]
  %v47 = vld [vmem:[%s1 + $0x3c] sm:$0xf]
  %v48 = vld [vmem:[%s1 + $0x40] sm:$0xf]
  %v49 = vld [vmem:[%s1 + $0x44] sm:$0xf]
  %v54 = vunpack.c.l.b16 %v28
  %v55 = vunpack.c.h.b16 %v28
  %v56 = vunpack.c.l.b16 %v29
  %v57 = vunpack.c.h.b16 %v29
  %v58 = vunpack.c.l.b16 %v30
  %v59 = vunpack.c.h.b16 %v30
  %v60 = vunpack.c.l.b16 %v31
  %v61 = vunpack.c.h.b16 %v31
  %v62 = vpack.c.b16 %v56, %v54
  %v63 = vpack.c.b16 %v57, %v55
  %v64 = vpack.c.b16 %v60, %v58
  %v65 = vpack.c.b16 %v61, %v59
  %v86 = vunpack.c.l.b16 %v32
  %v87 = vunpack.c.l.b16 %v33
  %v88 = vunpack.c.l.b16 %v34
  %v89 = vunpack.c.l.b16 %v35
  %v90 = vunpack.c.l.b16 %v36
  %v91 = vunpack.c.l.b16 %v37
  %v92 = vunpack.c.l.b16 %v38
  %v93 = vunpack.c.l.b16 %v39
  %v94 = vunpack.c.l.b16 %v40
  %v95 = vunpack.c.l.b16 %v41
  %v96 = vunpack.c.l.b16 %v42
  %v97 = vunpack.c.l.b16 %v43
  %v98 = vunpack.c.l.b16 %v44
  %v99 = vunpack.c.l.b16 %v45
  %v100 = vunpack.c.l.b16 %v46
  %v101 = vunpack.c.l.b16 %v47
  %v102 = vunpack.c.l.b16 %v48
  %v103 = vunpack.c.l.b16 %v49
  %v104 = vpack.c.b16 %v87, %v86
  %v105 = vpack.c.b16 %v89, %v88
  %v106 = vpack.c.b16 %v91, %v90
  %v107 = vpack.c.b16 %v93, %v92
  %v108 = vpack.c.b16 %v95, %v94
  %v109 = vpack.c.b16 %v97, %v96
  %v110 = vpack.c.b16 %v99, %v98
  %v111 = vpack.c.b16 %v101, %v100
  %v112 = vpack.c.b16 %v103, %v102
  %vm122 = vcmask 130048
  %v124 = vsel %vm122, %v63, 0
  %v127 = vsel %vm122, %v65, 0
  %129 = vmatprep.subr.bf16.mxu0 0
  %130 = vmatpush1.bf16.msra.mxu0 %v111
  %131 = vmatprep.subr.bf16.mxu0 0
  %132 = vmatpush1.bf16.msra.mxu0 %v110
  %133 = vmatprep.subr.bf16.mxu0 0
  %134 = vmatpush1.bf16.msra.mxu0 %v109
  %135 = vmatprep.subr.bf16.mxu0 0
  %136 = vmatpush1.bf16.msra.mxu0 %v108
  %137 = vmatprep.subr.bf16.mxu0 0
  %138 = vmatpush1.bf16.msra.mxu0 %v107
  %139 = vmatprep.subr.bf16.mxu0 0
  %140 = vmatpush1.bf16.msra.mxu0 %v106
  %141 = vmatprep.subr.bf16.mxu0 0
  %142 = vmatpush1.bf16.msra.mxu0 %v105
  %143 = vmatprep.subr.bf16.mxu0 0
  %144 = vmatpush1.bf16.msra.mxu0 %v104
  %145 = vmatprep.subr.bf16.mxu0 0
  %146 = vmatpush2.bf16.msra.mxu0 0
  %147 = vmatprep.subr.bf16.mxu0 0
  %148 = vmatpush2.bf16.msra.mxu0 0
  %149 = vmatprep.subr.bf16.mxu0 0
  %150 = vmatpush2.bf16.msra.mxu0 0
  %151 = vmatprep.subr.bf16.mxu0 0
  %152 = vmatpush2.bf16.msra.mxu0 0
  %153 = vmatprep.subr.bf16.mxu0 0
  %154 = vmatpush2.bf16.msra.mxu0 0
  %155 = vmatprep.subr.bf16.mxu0 0
  %156 = vmatpush2.bf16.msra.mxu0 0
  %157 = vmatprep.subr.bf16.mxu0 0
  %158 = vmatpush2.bf16.msra.mxu0 0
  %159 = vmatprep.subr.bf16.mxu0 0
  %160 = vmatpush2.bf16.msra.mxu0 %v112
  %161 = vmatprep.mubr.bf16.mxu0 %v124
  %162 = vmatmul.mubr.bf16.gmra.mxu0 %v62
  %v163 = vpop.f32.mrf.mxu0
  %v164 = vadd.f32 0.0, %v163
  %v165 = vpop.f32.mrf.mxu0
  %v166 = vpop.f32.mrf.mxu0
  %v167 = vadd.f32 0.0, %v166
  %v168 = vpop.f32.mrf.mxu0
  %169 = vmatprep.mubr.bf16.mxu0 %v127
  %170 = vmatmul.mubr.bf16.gmra.mxu0 %v64
  %v171 = vpop.f32.mrf.mxu0
  %v172 = vadd.f32 0.0, %v171
  %v173 = vpop.f32.mrf.mxu0
  %v174 = vpop.f32.mrf.mxu0
  %v175 = vadd.f32 0.0, %v174
  %v176 = vpop.f32.mrf.mxu0
  %177 = vdwg.mxu0
  %v178 = vadd.f32 %v24, %v164
  %v179 = vadd.f32 %v25, %v167
  %v180 = vadd.f32 %v26, %v172
  %v181 = vadd.f32 %v27, %v175
  %vm182 = vcmask 261120
  %183 = vst.msk [vmem:[#allocation2] sm:$0xff] %vm182, %v178
  %184 = vst.msk [vmem:[#allocation2 + $0x8] sm:$0xff] %vm182, %v179
  %185 = vst.msk [vmem:[#allocation2 + $0x10] sm:$0xff] %vm182, %v180
  %186 = vst.msk [vmem:[#allocation2 + $0x18] sm:$0xff] %vm182, %v181
  // Predicated region
  $region18: #{single_task_model_forward.8} parent=0 // pred_check
    %p187 = pneg %p15
  $region19: #{single_task_model_forward.8} parent=0 // pred_check_branch
    %189 = sbr.rel (%p187) target = $region21
  $region20: #{single_task_model_forward.8} parent=0 // pred_region
    %v190 = vld [vmem:[#allocation2] sm:$0xff]
    %v191 = vld [vmem:[#allocation2 + $0x8] sm:$0xff]
    %v192 = vld [vmem:[#allocation2 + $0x10] sm:$0xff]
    %v193 = vld [vmem:[#allocation2 + $0x18] sm:$0xff]
    %v194 = vld [vmem:[%s2] sm:$0x1]
    %v196 = vlaneseq
    %v197 = vshrl.u32 %v196, 7
    %v198 = vsub.s32 0, %v197
    %v199 = vrot.slane %v194, %v198
    %v201 = vadd.f32 %v190, %v199
    %v202 = vadd.f32 %v191, %v199
    %v203 = vadd.f32 %v192, %v199
    %v204 = vadd.f32 %v193, %v199
    %v205 = vmax.f32 %v201, 0.0
    %v206 = vmax.f32 %v202, 0.0
    %v207 = vmax.f32 %v203, 0.0
    %v208 = vmax.f32 %v204, 0.0
    %v209 = vpack.c.bf16 %v206, %v205
    %v210 = vpack.c.bf16 %v208, %v207
    %v213 = vunpack.c.l.b16 %v209
    %v214 = vunpack.c.h.b16 %v209
    %v215 = vunpack.c.l.b16 %v210
    %v216 = vunpack.c.h.b16 %v210
    %v217 = vpack.c.b16 %v213, %v213
    %v218 = vpack.c.b16 %v214, %v214
    %v219 = vpack.c.b16 %v215, %v215
    %v220 = vpack.c.b16 %v216, %v216
    %vm225 = vcmask 257024
    %226 = vst.msk [vmem:[%s3] sm:$0xf] %vm225, %v217
    %227 = vst.msk [vmem:[%s3 + $0x4] sm:$0xf] %vm225, %v218
    %228 = vst.msk [vmem:[%s3 + $0x8] sm:$0xf] %vm225, %v219
    %229 = vst.msk [vmem:[%s3 + $0xc] sm:$0xf] %vm225, %v220
  $region21: #{single_task_model_forward.8} parent=0 // pred_fallthru
    _
  // Predicated region
  $region22: #{single_task_model_forward.8} parent=0 // pred_check
    _
  $region23: #{single_task_model_forward.8} parent=0 // pred_check_branch
    %231 = sbr.rel (0) target = $region25
  $region24: #{single_task_model_forward.8} parent=0 // pred_region
    _
  $region25: #{single_task_model_forward.8} parent=0 // pred_fallthru
    _
  // Predicated region
  $region26: #{single_task_model_forward.8} parent=0 // pred_check
    _
  $region27: #{single_task_model_forward.8} parent=0 // pred_check_branch
    %233 = sbr.rel (0) target = $region29
  $region28: #{single_task_model_forward.8} parent=0 // pred_region
    _
  $region29: #{single_task_model_forward.8} parent=0 // pred_fallthru
    _

// kernel: single_task_model_forward.11
$region0: #{single_task_model_forward.11}
  #allocation0 [shape = 'u32[]', space=smem, size = 0x4, offset = 0x4, fixed_abs, tag = 'smem constant byte address 0x4 - core index']
  #allocation1 [shape = 'u32[144,128]{1,0:T(1,128)}', space=vmem, size = 0x12000, scoped, tag = 'internal scratch']
  #allocation2 [shape = 'f32[32,5]{1,0:T(8,128)}', space=vmem, size = 0x4000, scoped, tag = 'scratch operand']
  %s0 = inlined_call_operand.vmem [shape: bf16[32,32], index: 0, kind: input, shape index: {}]
  %s1 = inlined_call_operand.vmem [shape: bf16[32,5], index: 1, kind: input, shape index: {}]
  %s2 = inlined_call_operand.vmem [shape: f32[1,5], index: 2, kind: input, shape index: {}]
  %s3 = inlined_call_operand.vmem [shape: f32[32,5], index: 3, kind: output, shape index: {}]
  %s4 = sld [smem:[#allocation0]]
  $region30: #{single_task_model_forward.11} parent=0
    _
  %s6 = ssub.s32 1, %s4
  %s7 = scalar_select 0, %s6, %s4
  // Predicated region
  $region2: #{single_task_model_forward.11} parent=0 // pred_check
    _
  $region3: #{single_task_model_forward.11} parent=0 // pred_check_branch
    %9 = sbr.rel (0) target = $region5
  $region4: #{single_task_model_forward.11} parent=0 // pred_region
    _
  $region5: #{single_task_model_forward.11} parent=0 // pred_fallthru
    _
  // Predicated region
  $region6: #{single_task_model_forward.11} parent=0 // pred_check
    _
  $region7: #{single_task_model_forward.11} parent=0 // pred_check_branch
    %11 = sbr.rel (0) target = $region9
  $region8: #{single_task_model_forward.11} parent=0 // pred_region
    _
  $region9: #{single_task_model_forward.11} parent=0 // pred_fallthru
    _
  // Predicated region
  $region10: #{single_task_model_forward.11} parent=0 // pred_check
    _
  $region11: #{single_task_model_forward.11} parent=0 // pred_check_branch
    %13 = sbr.rel (0) target = $region13
  $region12: #{single_task_model_forward.11} parent=0 // pred_region
    _
  $region13: #{single_task_model_forward.11} parent=0 // pred_fallthru
    _
  %p15 = scmp.eq.s32.totalorder 0, 0
  // Predicated region
  $region14: #{single_task_model_forward.11} parent=0 // pred_check
    %p16 = pneg %p15
  $region15: #{single_task_model_forward.11} parent=0 // pred_check_branch
    %18 = sbr.rel (%p16) target = $region17
  $region16: #{single_task_model_forward.11} parent=0 // pred_region
    %vm19 = vcmask 39936
    %20 = vst.msk [vmem:[#allocation2] sm:$0xff] %vm19, 0.0
    %21 = vst.msk [vmem:[#allocation2 + $0x8] sm:$0xff] %vm19, 0.0
    %22 = vst.msk [vmem:[#allocation2 + $0x10] sm:$0xff] %vm19, 0.0
    %23 = vst.msk [vmem:[#allocation2 + $0x18] sm:$0xff] %vm19, 0.0
  $region17: #{single_task_model_forward.11} parent=0 // pred_fallthru
    _
  %v24 = vld [vmem:[#allocation2] sm:$0xff]
  %v25 = vld [vmem:[#allocation2 + $0x8] sm:$0xff]
  %v26 = vld [vmem:[#allocation2 + $0x10] sm:$0xff]
  %v27 = vld [vmem:[#allocation2 + $0x18] sm:$0xff]
  %v28 = vld [vmem:[%s0] sm:$0xf]
  %v29 = vld [vmem:[%s0 + $0x4] sm:$0xf]
  %v30 = vld [vmem:[%s0 + $0x8] sm:$0xf]
  %v31 = vld [vmem:[%s0 + $0xc] sm:$0xf]
  %v32 = vld [vmem:[%s1] sm:$0xf]
  %v33 = vld [vmem:[%s1 + $0x4] sm:$0xf]
  %v34 = vld [vmem:[%s1 + $0x8] sm:$0xf]
  %v35 = vld [vmem:[%s1 + $0xc] sm:$0xf]
  %v40 = vunpack.c.l.b16 %v28
  %v41 = vunpack.c.l.b16 %v29
  %v42 = vunpack.c.l.b16 %v30
  %v43 = vunpack.c.l.b16 %v31
  %v44 = vpack.c.b16 %v41, %v40
  %v45 = vpack.c.b16 %v43, %v42
  %v50 = vunpack.c.l.b16 %v32
  %v51 = vunpack.c.l.b16 %v33
  %v52 = vunpack.c.l.b16 %v34
  %v53 = vunpack.c.l.b16 %v35
  %v54 = vpack.c.b16 %v51, %v50
  %v55 = vpack.c.b16 %v53, %v52
  %vm58 = vcmask 261120
  %v60 = vsel %vm58, %v44, 0
  %v63 = vsel %vm58, %v45, 0
  %65 = vmatprep.subr.bf16.mxu0 0
  %66 = vmatpush1.bf16.msra.mxu0 0
  %67 = vmatprep.subr.bf16.mxu0 0
  %68 = vmatpush1.bf16.msra.mxu0 0
  %69 = vmatprep.subr.bf16.mxu0 0
  %70 = vmatpush1.bf16.msra.mxu0 0
  %71 = vmatprep.subr.bf16.mxu0 0
  %72 = vmatpush1.bf16.msra.mxu0 0
  %73 = vmatprep.subr.bf16.mxu0 0
  %74 = vmatpush1.bf16.msra.mxu0 0
  %75 = vmatprep.subr.bf16.mxu0 0
  %76 = vmatpush1.bf16.msra.mxu0 0
  %77 = vmatprep.subr.bf16.mxu0 0
  %78 = vmatpush1.bf16.msra.mxu0 %v55
  %79 = vmatprep.subr.bf16.mxu0 0
  %80 = vmatpush1.bf16.msra.mxu0 %v54
  %81 = vmatprep.subr.bf16.mxu0 0
  %82 = vmatpush2.bf16.msra.mxu0 0
  %83 = vmatprep.subr.bf16.mxu0 0
  %84 = vmatpush2.bf16.msra.mxu0 0
  %85 = vmatprep.subr.bf16.mxu0 0
  %86 = vmatpush2.bf16.msra.mxu0 0
  %87 = vmatprep.subr.bf16.mxu0 0
  %88 = vmatpush2.bf16.msra.mxu0 0
  %89 = vmatprep.subr.bf16.mxu0 0
  %90 = vmatpush2.bf16.msra.mxu0 0
  %91 = vmatprep.subr.bf16.mxu0 0
  %92 = vmatpush2.bf16.msra.mxu0 0
  %93 = vmatprep.subr.bf16.mxu0 0
  %94 = vmatpush2.bf16.msra.mxu0 0
  %95 = vmatprep.subr.bf16.mxu0 0
  %96 = vmatpush2.bf16.msra.mxu0 0
  %97 = vmatprep.mubr.bf16.mxu0 0
  %98 = vmatmul.mubr.bf16.gmra.mxu0 %v60
  %v99 = vpop.f32.mrf.mxu0
  %v100 = vadd.f32 0.0, %v99
  %v101 = vpop.f32.mrf.mxu0
  %v102 = vpop.f32.mrf.mxu0
  %v103 = vadd.f32 0.0, %v102
  %v104 = vpop.f32.mrf.mxu0
  %105 = vmatprep.mubr.bf16.mxu0 0
  %106 = vmatmul.mubr.bf16.gmra.mxu0 %v63
  %v107 = vpop.f32.mrf.mxu0
  %v108 = vadd.f32 0.0, %v107
  %v109 = vpop.f32.mrf.mxu0
  %v110 = vpop.f32.mrf.mxu0
  %v111 = vadd.f32 0.0, %v110
  %v112 = vpop.f32.mrf.mxu0
  %113 = vdwg.mxu0
  %v114 = vadd.f32 %v24, %v100
  %v115 = vadd.f32 %v25, %v103
  %v116 = vadd.f32 %v26, %v108
  %v117 = vadd.f32 %v27, %v111
  %vm118 = vcmask 39936
  %119 = vst.msk [vmem:[#allocation2] sm:$0xff] %vm118, %v114
  %120 = vst.msk [vmem:[#allocation2 + $0x8] sm:$0xff] %vm118, %v115
  %121 = vst.msk [vmem:[#allocation2 + $0x10] sm:$0xff] %vm118, %v116
  %122 = vst.msk [vmem:[#allocation2 + $0x18] sm:$0xff] %vm118, %v117
  // Predicated region
  $region18: #{single_task_model_forward.11} parent=0 // pred_check
    %p123 = pneg %p15
  $region19: #{single_task_model_forward.11} parent=0 // pred_check_branch
    %125 = sbr.rel (%p123) target = $region21
  $region20: #{single_task_model_forward.11} parent=0 // pred_region
    %v126 = vld [vmem:[#allocation2] sm:$0xff]
    %v127 = vld [vmem:[#allocation2 + $0x8] sm:$0xff]
    %v128 = vld [vmem:[#allocation2 + $0x10] sm:$0xff]
    %v129 = vld [vmem:[#allocation2 + $0x18] sm:$0xff]
    %v130 = vld [vmem:[%s2] sm:$0x1]
    %v132 = vlaneseq
    %v133 = vshrl.u32 %v132, 7
    %v134 = vsub.s32 0, %v133
    %v135 = vrot.slane %v130, %v134
    %v137 = vadd.f32 %v126, %v135
    %v138 = vadd.f32 %v127, %v135
    %v139 = vadd.f32 %v128, %v135
    %v140 = vadd.f32 %v129, %v135
    %141 = vst.msk [vmem:[%s3] sm:$0xff] %vm118, %v137
    %142 = vst.msk [vmem:[%s3 + $0x8] sm:$0xff] %vm118, %v138
    %143 = vst.msk [vmem:[%s3 + $0x10] sm:$0xff] %vm118, %v139
    %144 = vst.msk [vmem:[%s3 + $0x18] sm:$0xff] %vm118, %v140
  $region21: #{single_task_model_forward.11} parent=0 // pred_fallthru
    _
  // Predicated region
  $region22: #{single_task_model_forward.11} parent=0 // pred_check
    _
  $region23: #{single_task_model_forward.11} parent=0 // pred_check_branch
    %146 = sbr.rel (0) target = $region25
  $region24: #{single_task_model_forward.11} parent=0 // pred_region
    _
  $region25: #{single_task_model_forward.11} parent=0 // pred_fallthru
    _
  // Predicated region
  $region26: #{single_task_model_forward.11} parent=0 // pred_check
    _
  $region27: #{single_task_model_forward.11} parent=0 // pred_check_branch
    %148 = sbr.rel (0) target = $region29
  $region28: #{single_task_model_forward.11} parent=0 // pred_region
    _
  $region29: #{single_task_model_forward.11} parent=0 // pred_fallthru
    _

// kernel: single_task_model_forward.10
$region0: #{single_task_model_forward.10}
  #allocation0 [shape = 'u32[]', space=smem, size = 0x4, offset = 0x4, fixed_abs, tag = 'smem constant byte address 0x4 - core index']
  #allocation1 [shape = 'u32[144,128]{1,0:T(1,128)}', space=vmem, size = 0x12000, scoped, tag = 'internal scratch']
  #allocation2 [shape = 'f32[2,16]{1,0:T(2,128)}', space=vmem, size = 0x400, scoped, tag = 'scratch operand']
  %s0 = inlined_call_operand.vmem [shape: bf16[2,32], index: 0, kind: input, shape index: {}]
  %s1 = inlined_call_operand.vmem [shape: bf16[32,16], index: 1, kind: input, shape index: {}]
  %s2 = inlined_call_operand.vmem [shape: f32[1,16], index: 2, kind: input, shape index: {}]
  %s3 = inlined_call_operand.vmem [shape: f32[2,16], index: 3, kind: output, shape index: {}]
  %s4 = sld [smem:[#allocation0]]
  $region30: #{single_task_model_forward.10} parent=0
    _
  %s6 = ssub.s32 1, %s4
  %s7 = scalar_select 0, %s6, %s4
  // Predicated region
  $region2: #{single_task_model_forward.10} parent=0 // pred_check
    _
  $region3: #{single_task_model_forward.10} parent=0 // pred_check_branch
    %9 = sbr.rel (0) target = $region5
  $region4: #{single_task_model_forward.10} parent=0 // pred_region
    _
  $region5: #{single_task_model_forward.10} parent=0 // pred_fallthru
    _
  // Predicated region
  $region6: #{single_task_model_forward.10} parent=0 // pred_check
    _
  $region7: #{single_task_model_forward.10} parent=0 // pred_check_branch
    %11 = sbr.rel (0) target = $region9
  $region8: #{single_task_model_forward.10} parent=0 // pred_region
    _
  $region9: #{single_task_model_forward.10} parent=0 // pred_fallthru
    _
  // Predicated region
  $region10: #{single_task_model_forward.10} parent=0 // pred_check
    _
  $region11: #{single_task_model_forward.10} parent=0 // pred_check_branch
    %13 = sbr.rel (0) target = $region13
  $region12: #{single_task_model_forward.10} parent=0 // pred_region
    _
  $region13: #{single_task_model_forward.10} parent=0 // pred_fallthru
    _
  %p15 = scmp.eq.s32.totalorder 0, 0
  // Predicated region
  $region14: #{single_task_model_forward.10} parent=0 // pred_check
    %p16 = pneg %p15
  $region15: #{single_task_model_forward.10} parent=0 // pred_check_branch
    %18 = sbr.rel (%p16) target = $region17
  $region16: #{single_task_model_forward.10} parent=0 // pred_region
    %vm19 = vcmask 123904
    %20 = vst.msk [vmem:[#allocation2] sm:$0x3] %vm19, 0.0
  $region17: #{single_task_model_forward.10} parent=0 // pred_fallthru
    _
  %v21 = vld [vmem:[#allocation2] sm:$0x3]
  %v22 = vld [vmem:[%s0] sm:$0x1]
  %v23 = vld [vmem:[%s1] sm:$0xf]
  %v24 = vld [vmem:[%s1 + $0x4] sm:$0xf]
  %v25 = vld [vmem:[%s1 + $0x8] sm:$0xf]
  %v26 = vld [vmem:[%s1 + $0xc] sm:$0xf]
  %v31 = vunpack.c.l.b16 %v23
  %v32 = vunpack.c.l.b16 %v24
  %v33 = vunpack.c.l.b16 %v25
  %v34 = vunpack.c.l.b16 %v26
  %v35 = vpack.c.b16 %v32, %v31
  %v36 = vpack.c.b16 %v34, %v33
  %vm39 = vcmask 261120
  %v41 = vsel %vm39, %v22, 0
  %43 = vmatprep.subr.bf16.mxu0 0
  %44 = vmatpush1.bf16.msra.mxu0 0
  %45 = vmatprep.subr.bf16.mxu0 0
  %46 = vmatpush1.bf16.msra.mxu0 0
  %47 = vmatprep.subr.bf16.mxu0 0
  %48 = vmatpush1.bf16.msra.mxu0 0
  %49 = vmatprep.subr.bf16.mxu0 0
  %50 = vmatpush1.bf16.msra.mxu0 0
  %51 = vmatprep.subr.bf16.mxu0 0
  %52 = vmatpush1.bf16.msra.mxu0 0
  %53 = vmatprep.subr.bf16.mxu0 0
  %54 = vmatpush1.bf16.msra.mxu0 0
  %55 = vmatprep.subr.bf16.mxu0 0
  %56 = vmatpush1.bf16.msra.mxu0 %v36
  %57 = vmatprep.subr.bf16.mxu0 0
  %58 = vmatpush1.bf16.msra.mxu0 %v35
  %59 = vmatprep.subr.bf16.mxu0 0
  %60 = vmatpush2.bf16.msra.mxu0 0
  %61 = vmatprep.subr.bf16.mxu0 0
  %62 = vmatpush2.bf16.msra.mxu0 0
  %63 = vmatprep.subr.bf16.mxu0 0
  %64 = vmatpush2.bf16.msra.mxu0 0
  %65 = vmatprep.subr.bf16.mxu0 0
  %66 = vmatpush2.bf16.msra.mxu0 0
  %67 = vmatprep.subr.bf16.mxu0 0
  %68 = vmatpush2.bf16.msra.mxu0 0
  %69 = vmatprep.subr.bf16.mxu0 0
  %70 = vmatpush2.bf16.msra.mxu0 0
  %71 = vmatprep.subr.bf16.mxu0 0
  %72 = vmatpush2.bf16.msra.mxu0 0
  %73 = vmatprep.subr.bf16.mxu0 0
  %74 = vmatpush2.bf16.msra.mxu0 0
  %75 = vmatprep.mubr.bf16.mxu0 0
  %76 = vmatmul.mubr.bf16.gmra.mxu0 %v41
  %v77 = vpop.f32.mrf.mxu0
  %v78 = vadd.f32 0.0, %v77
  %v79 = vpop.f32.mrf.mxu0
  %v80 = vpop.f32.mrf.mxu0
  %v81 = vpop.f32.mrf.mxu0
  %82 = vdwg.mxu0
  %v83 = vadd.f32 %v21, %v78
  %vm84 = vcmask 123904
  %85 = vst.msk [vmem:[#allocation2] sm:$0x3] %vm84, %v83
  // Predicated region
  $region18: #{single_task_model_forward.10} parent=0 // pred_check
    %p86 = pneg %p15
  $region19: #{single_task_model_forward.10} parent=0 // pred_check_branch
    %88 = sbr.rel (%p86) target = $region21
  $region20: #{single_task_model_forward.10} parent=0 // pred_region
    %v89 = vld [vmem:[#allocation2] sm:$0x3]
    %v90 = vld [vmem:[%s2] sm:$0x1]
    %v92 = vlaneseq
    %v93 = vshrl.u32 %v92, 7
    %v94 = vsub.s32 0, %v93
    %v95 = vrot.slane %v90, %v94
    %v97 = vadd.f32 %v89, %v95
    %v98 = vmax.f32 %v97, 0.0
    %99 = vst.msk [vmem:[%s3] sm:$0x3] %vm84, %v98
  $region21: #{single_task_model_forward.10} parent=0 // pred_fallthru
    _
  // Predicated region
  $region22: #{single_task_model_forward.10} parent=0 // pred_check
    _
  $region23: #{single_task_model_forward.10} parent=0 // pred_check_branch
    %101 = sbr.rel (0) target = $region25
  $region24: #{single_task_model_forward.10} parent=0 // pred_region
    _
  $region25: #{single_task_model_forward.10} parent=0 // pred_fallthru
    _
  // Predicated region
  $region26: #{single_task_model_forward.10} parent=0 // pred_check
    _
  $region27: #{single_task_model_forward.10} parent=0 // pred_check_branch
    %103 = sbr.rel (0) target = $region29
  $region28: #{single_task_model_forward.10} parent=0 // pred_region
    _
  $region29: #{single_task_model_forward.10} parent=0 // pred_fallthru
    _

// kernel: single_task_model_forward.9
$region0: #{single_task_model_forward.9}
  #allocation0 [shape = 'u32[]', space=smem, size = 0x4, offset = 0x4, fixed_abs, tag = 'smem constant byte address 0x4 - core index']
  #allocation1 [shape = 'u32[144,128]{1,0:T(1,128)}', space=vmem, size = 0x12000, scoped, tag = 'internal scratch']
  #allocation2 [shape = 'f32[32,32]{1,0:T(8,128)}', space=vmem, size = 0x4000, scoped, tag = 'scratch operand']
  %s0 = inlined_call_operand.vmem [shape: bf16[32,288], index: 0, kind: input, shape index: {}]
  %s1 = inlined_call_operand.vmem [shape: bf16[288,32], index: 1, kind: input, shape index: {}]
  %s2 = inlined_call_operand.vmem [shape: f32[1,32], index: 2, kind: input, shape index: {}]
  %s3 = inlined_call_operand.vmem [shape: bf16[32,32], index: 3, kind: output, shape index: {}]
  %s4 = sld [smem:[#allocation0]]
  $region30: #{single_task_model_forward.9} parent=0
    _
  %s6 = ssub.s32 1, %s4
  %s7 = scalar_select 0, %s6, %s4
  // Predicated region
  $region2: #{single_task_model_forward.9} parent=0 // pred_check
    _
  $region3: #{single_task_model_forward.9} parent=0 // pred_check_branch
    %9 = sbr.rel (0) target = $region5
  $region4: #{single_task_model_forward.9} parent=0 // pred_region
    _
  $region5: #{single_task_model_forward.9} parent=0 // pred_fallthru
    _
  // Predicated region
  $region6: #{single_task_model_forward.9} parent=0 // pred_check
    _
  $region7: #{single_task_model_forward.9} parent=0 // pred_check_branch
    %11 = sbr.rel (0) target = $region9
  $region8: #{single_task_model_forward.9} parent=0 // pred_region
    _
  $region9: #{single_task_model_forward.9} parent=0 // pred_fallthru
    _
  // Predicated region
  $region10: #{single_task_model_forward.9} parent=0 // pred_check
    _
  $region11: #{single_task_model_forward.9} parent=0 // pred_check_branch
    %13 = sbr.rel (0) target = $region13
  $region12: #{single_task_model_forward.9} parent=0 // pred_region
    _
  $region13: #{single_task_model_forward.9} parent=0 // pred_fallthru
    _
  %p15 = scmp.eq.s32.totalorder 0, 0
  // Predicated region
  $region14: #{single_task_model_forward.9} parent=0 // pred_check
    %p16 = pneg %p15
  $region15: #{single_task_model_forward.9} parent=0 // pred_check_branch
    %18 = sbr.rel (%p16) target = $region17
  $region16: #{single_task_model_forward.9} parent=0 // pred_region
    %vm19 = vcmask 261120
    %20 = vst.msk [vmem:[#allocation2] sm:$0xff] %vm19, 0.0
    %21 = vst.msk [vmem:[#allocation2 + $0x8] sm:$0xff] %vm19, 0.0
    %22 = vst.msk [vmem:[#allocation2 + $0x10] sm:$0xff] %vm19, 0.0
    %23 = vst.msk [vmem:[#allocation2 + $0x18] sm:$0xff] %vm19, 0.0
  $region17: #{single_task_model_forward.9} parent=0 // pred_fallthru
    _
  %v24 = vld [vmem:[#allocation2] sm:$0xff]
  %v25 = vld [vmem:[#allocation2 + $0x8] sm:$0xff]
  %v26 = vld [vmem:[#allocation2 + $0x10] sm:$0xff]
  %v27 = vld [vmem:[#allocation2 + $0x18] sm:$0xff]
  %v28 = vld [vmem:[%s0] sm:$0xff]
  %v29 = vld [vmem:[%s0 + $0x8] sm:$0xf]
  %v30 = vld [vmem:[%s0 + $0xc] sm:$0xff]
  %v31 = vld [vmem:[%s0 + $0x14] sm:$0xf]
  %v32 = vld [vmem:[%s0 + $0x18] sm:$0xff]
  %v33 = vld [vmem:[%s0 + $0x20] sm:$0xf]
  %v34 = vld [vmem:[%s0 + $0x24] sm:$0xff]
  %v35 = vld [vmem:[%s0 + $0x2c] sm:$0xf]
  %v36 = vld [vmem:[%s1] sm:$0xf]
  %v37 = vld [vmem:[%s1 + $0x4] sm:$0xf]
  %v38 = vld [vmem:[%s1 + $0x8] sm:$0xf]
  %v39 = vld [vmem:[%s1 + $0xc] sm:$0xf]
  %v40 = vld [vmem:[%s1 + $0x10] sm:$0xf]
  %v41 = vld [vmem:[%s1 + $0x14] sm:$0xf]
  %v42 = vld [vmem:[%s1 + $0x18] sm:$0xf]
  %v43 = vld [vmem:[%s1 + $0x1c] sm:$0xf]
  %v44 = vld [vmem:[%s1 + $0x20] sm:$0xf]
  %v45 = vld [vmem:[%s1 + $0x24] sm:$0xf]
  %v46 = vld [vmem:[%s1 + $0x28] sm:$0xf]
  %v47 = vld [vmem:[%s1 + $0x2c] sm:$0xf]
  %v48 = vld [vmem:[%s1 + $0x30] sm:$0xf]
  %v49 = vld [vmem:[%s1 + $0x34] sm:$0xf]
  %v50 = vld [vmem:[%s1 + $0x38] sm:$0xf]
  %v51 = vld [vmem:[%s1 + $0x3c] sm:$0xf]
  %v52 = vld [vmem:[%s1 + $0x40] sm:$0xf]
  %v53 = vld [vmem:[%s1 + $0x44] sm:$0xf]
  %v54 = vld [vmem:[%s1 + $0x48] sm:$0xf]
  %v55 = vld [vmem:[%s1 + $0x4c] sm:$0xf]
  %v56 = vld [vmem:[%s1 + $0x50] sm:$0xf]
  %v57 = vld [vmem:[%s1 + $0x54] sm:$0xf]
  %v58 = vld [vmem:[%s1 + $0x58] sm:$0xf]
  %v59 = vld [vmem:[%s1 + $0x5c] sm:$0xf]
  %v60 = vld [vmem:[%s1 + $0x60] sm:$0xf]
  %v61 = vld [vmem:[%s1 + $0x64] sm:$0xf]
  %v62 = vld [vmem:[%s1 + $0x68] sm:$0xf]
  %v63 = vld [vmem:[%s1 + $0x6c] sm:$0xf]
  %v64 = vld [vmem:[%s1 + $0x70] sm:$0xf]
  %v65 = vld [vmem:[%s1 + $0x74] sm:$0xf]
  %v66 = vld [vmem:[%s1 + $0x78] sm:$0xf]
  %v67 = vld [vmem:[%s1 + $0x7c] sm:$0xf]
  %v68 = vld [vmem:[%s1 + $0x80] sm:$0xf]
  %v69 = vld [vmem:[%s1 + $0x84] sm:$0xf]
  %v70 = vld [vmem:[%s1 + $0x88] sm:$0xf]
  %v71 = vld [vmem:[%s1 + $0x8c] sm:$0xf]
  %v80 = vunpack.c.l.b16 %v28
  %v81 = vunpack.c.h.b16 %v28
  %v82 = vunpack.c.l.b16 %v29
  %v83 = vunpack.c.l.b16 %v30
  %v84 = vunpack.c.h.b16 %v30
  %v85 = vunpack.c.l.b16 %v31
  %v86 = vunpack.c.l.b16 %v32
  %v87 = vunpack.c.h.b16 %v32
  %v88 = vunpack.c.l.b16 %v33
  %v89 = vunpack.c.l.b16 %v34
  %v90 = vunpack.c.h.b16 %v34
  %v91 = vunpack.c.l.b16 %v35
  %v92 = vpack.c.b16 %v83, %v80
  %v93 = vpack.c.b16 %v84, %v81
  %v94 = vpack.c.b16 %v85, %v82
  %v95 = vpack.c.b16 %v89, %v86
  %v96 = vpack.c.b16 %v90, %v87
  %v97 = vpack.c.b16 %v91, %v88
  %v138 = vunpack.c.l.b16 %v36
  %v139 = vunpack.c.l.b16 %v37
  %v140 = vunpack.c.l.b16 %v38
  %v141 = vunpack.c.l.b16 %v39
  %v142 = vunpack.c.l.b16 %v40
  %v143 = vunpack.c.l.b16 %v41
  %v144 = vunpack.c.l.b16 %v42
  %v145 = vunpack.c.l.b16 %v43
  %v146 = vunpack.c.l.b16 %v44
  %v147 = vunpack.c.l.b16 %v45
  %v148 = vunpack.c.l.b16 %v46
  %v149 = vunpack.c.l.b16 %v47
  %v150 = vunpack.c.l.b16 %v48
  %v151 = vunpack.c.l.b16 %v49
  %v152 = vunpack.c.l.b16 %v50
  %v153 = vunpack.c.l.b16 %v51
  %v154 = vunpack.c.l.b16 %v52
  %v155 = vunpack.c.l.b16 %v53
  %v156 = vunpack.c.l.b16 %v54
  %v157 = vunpack.c.l.b16 %v55
  %v158 = vunpack.c.l.b16 %v56
  %v159 = vunpack.c.l.b16 %v57
  %v160 = vunpack.c.l.b16 %v58
  %v161 = vunpack.c.l.b16 %v59
  %v162 = vunpack.c.l.b16 %v60
  %v163 = vunpack.c.l.b16 %v61
  %v164 = vunpack.c.l.b16 %v62
  %v165 = vunpack.c.l.b16 %v63
  %v166 = vunpack.c.l.b16 %v64
  %v167 = vunpack.c.l.b16 %v65
  %v168 = vunpack.c.l.b16 %v66
  %v169 = vunpack.c.l.b16 %v67
  %v170 = vunpack.c.l.b16 %v68
  %v171 = vunpack.c.l.b16 %v69
  %v172 = vunpack.c.l.b16 %v70
  %v173 = vunpack.c.l.b16 %v71
  %v174 = vpack.c.b16 %v139, %v138
  %v175 = vpack.c.b16 %v141, %v140
  %v176 = vpack.c.b16 %v143, %v142
  %v177 = vpack.c.b16 %v145, %v144
  %v178 = vpack.c.b16 %v147, %v146
  %v179 = vpack.c.b16 %v149, %v148
  %v180 = vpack.c.b16 %v151, %v150
  %v181 = vpack.c.b16 %v153, %v152
  %v182 = vpack.c.b16 %v155, %v154
  %v183 = vpack.c.b16 %v157, %v156
  %v184 = vpack.c.b16 %v159, %v158
  %v185 = vpack.c.b16 %v161, %v160
  %v186 = vpack.c.b16 %v163, %v162
  %v187 = vpack.c.b16 %v165, %v164
  %v188 = vpack.c.b16 %v167, %v166
  %v189 = vpack.c.b16 %v169, %v168
  %v190 = vpack.c.b16 %v171, %v170
  %v191 = vpack.c.b16 %v173, %v172
  %vm210 = vcmask 261120
  %v212 = vsel %vm210, %v94, 0
  %v215 = vsel %vm210, %v97, 0
  %217 = vmatprep.subr.bf16.mxu0 0
  %218 = vmatpush1.bf16.msra.mxu0 %v181
  %219 = vmatprep.subr.bf16.mxu0 0
  %220 = vmatpush1.bf16.msra.mxu0 %v180
  %221 = vmatprep.subr.bf16.mxu0 0
  %222 = vmatpush1.bf16.msra.mxu0 %v179
  %223 = vmatprep.subr.bf16.mxu0 0
  %224 = vmatpush1.bf16.msra.mxu0 %v178
  %225 = vmatprep.subr.bf16.mxu0 0
  %226 = vmatpush1.bf16.msra.mxu0 %v177
  %227 = vmatprep.subr.bf16.mxu0 0
  %228 = vmatpush1.bf16.msra.mxu0 %v176
  %229 = vmatprep.subr.bf16.mxu0 0
  %230 = vmatpush1.bf16.msra.mxu0 %v175
  %231 = vmatprep.subr.bf16.mxu0 0
  %232 = vmatpush1.bf16.msra.mxu0 %v174
  %233 = vmatprep.subr.bf16.mxu0 0
  %234 = vmatpush2.bf16.msra.mxu0 %v189
  %235 = vmatprep.subr.bf16.mxu0 0
  %236 = vmatpush2.bf16.msra.mxu0 %v188
  %237 = vmatprep.subr.bf16.mxu0 0
  %238 = vmatpush2.bf16.msra.mxu0 %v187
  %239 = vmatprep.subr.bf16.mxu0 0
  %240 = vmatpush2.bf16.msra.mxu0 %v186
  %241 = vmatprep.subr.bf16.mxu0 0
  %242 = vmatpush2.bf16.msra.mxu0 %v185
  %243 = vmatprep.subr.bf16.mxu0 0
  %244 = vmatpush2.bf16.msra.mxu0 %v184
  %245 = vmatprep.subr.bf16.mxu0 0
  %246 = vmatpush2.bf16.msra.mxu0 %v183
  %247 = vmatprep.subr.bf16.mxu0 0
  %248 = vmatpush2.bf16.msra.mxu0 %v182
  %249 = vmatprep.mubr.bf16.mxu0 %v93
  %250 = vmatmul.mubr.bf16.gmra.mxu0 %v92
  %v251 = vpop.f32.mrf.mxu0
  %v252 = vadd.f32 0.0, %v251
  %v253 = vpop.f32.mrf.mxu0
  %v254 = vpop.f32.mrf.mxu0
  %v255 = vadd.f32 0.0, %v254
  %v256 = vpop.f32.mrf.mxu0
  %257 = vmatprep.mubr.bf16.mxu0 %v96
  %258 = vmatmul.mubr.bf16.gmra.mxu0 %v95
  %v259 = vpop.f32.mrf.mxu0
  %v260 = vadd.f32 0.0, %v259
  %v261 = vpop.f32.mrf.mxu0
  %v262 = vpop.f32.mrf.mxu0
  %v263 = vadd.f32 0.0, %v262
  %v264 = vpop.f32.mrf.mxu0
  %265 = vdwg.mxu0
  %266 = vmatprep.subr.bf16.mxu0 0
  %267 = vmatpush1.bf16.msra.mxu0 0
  %268 = vmatprep.subr.bf16.mxu0 0
  %269 = vmatpush1.bf16.msra.mxu0 0
  %270 = vmatprep.subr.bf16.mxu0 0
  %271 = vmatpush1.bf16.msra.mxu0 0
  %272 = vmatprep.subr.bf16.mxu0 0
  %273 = vmatpush1.bf16.msra.mxu0 0
  %274 = vmatprep.subr.bf16.mxu0 0
  %275 = vmatpush1.bf16.msra.mxu0 0
  %276 = vmatprep.subr.bf16.mxu0 0
  %277 = vmatpush1.bf16.msra.mxu0 0
  %278 = vmatprep.subr.bf16.mxu0 0
  %279 = vmatpush1.bf16.msra.mxu0 %v191
  %280 = vmatprep.subr.bf16.mxu0 0
  %281 = vmatpush1.bf16.msra.mxu0 %v190
  %282 = vmatprep.subr.bf16.mxu0 0
  %283 = vmatpush2.bf16.msra.mxu0 0
  %284 = vmatprep.subr.bf16.mxu0 0
  %285 = vmatpush2.bf16.msra.mxu0 0
  %286 = vmatprep.subr.bf16.mxu0 0
  %287 = vmatpush2.bf16.msra.mxu0 0
  %288 = vmatprep.subr.bf16.mxu0 0
  %289 = vmatpush2.bf16.msra.mxu0 0
  %290 = vmatprep.subr.bf16.mxu0 0
  %291 = vmatpush2.bf16.msra.mxu0 0
  %292 = vmatprep.subr.bf16.mxu0 0
  %293 = vmatpush2.bf16.msra.mxu0 0
  %294 = vmatprep.subr.bf16.mxu0 0
  %295 = vmatpush2.bf16.msra.mxu0 0
  %296 = vmatprep.subr.bf16.mxu0 0
  %297 = vmatpush2.bf16.msra.mxu0 0
  %298 = vmatprep.mubr.bf16.mxu0 0
  %299 = vmatmul.mubr.bf16.gmra.mxu0 %v212
  %v300 = vpop.f32.mrf.mxu0
  %v301 = vadd.f32 %v252, %v300
  %v302 = vpop.f32.mrf.mxu0
  %v303 = vpop.f32.mrf.mxu0
  %v304 = vadd.f32 %v255, %v303
  %v305 = vpop.f32.mrf.mxu0
  %306 = vmatprep.mubr.bf16.mxu0 0
  %307 = vmatmul.mubr.bf16.gmra.mxu0 %v215
  %v308 = vpop.f32.mrf.mxu0
  %v309 = vadd.f32 %v260, %v308
  %v310 = vpop.f32.mrf.mxu0
  %v311 = vpop.f32.mrf.mxu0
  %v312 = vadd.f32 %v263, %v311
  %v313 = vpop.f32.mrf.mxu0
  %314 = vdwg.mxu0
  %v315 = vadd.f32 %v24, %v301
  %v316 = vadd.f32 %v25, %v304
  %v317 = vadd.f32 %v26, %v309
  %v318 = vadd.f32 %v27, %v312
  %319 = vst.msk [vmem:[#allocation2] sm:$0xff] %vm210, %v315
  %320 = vst.msk [vmem:[#allocation2 + $0x8] sm:$0xff] %vm210, %v316
  %321 = vst.msk [vmem:[#allocation2 + $0x10] sm:$0xff] %vm210, %v317
  %322 = vst.msk [vmem:[#allocation2 + $0x18] sm:$0xff] %vm210, %v318
  // Predicated region
  $region18: #{single_task_model_forward.9} parent=0 // pred_check
    %p323 = pneg %p15
  $region19: #{single_task_model_forward.9} parent=0 // pred_check_branch
    %325 = sbr.rel (%p323) target = $region21
  $region20: #{single_task_model_forward.9} parent=0 // pred_region
    %v326 = vld [vmem:[#allocation2] sm:$0xff]
    %v327 = vld [vmem:[#allocation2 + $0x8] sm:$0xff]
    %v328 = vld [vmem:[#allocation2 + $0x10] sm:$0xff]
    %v329 = vld [vmem:[#allocation2 + $0x18] sm:$0xff]
    %v330 = vld [vmem:[%s2] sm:$0x1]
    %v332 = vlaneseq
    %v333 = vshrl.u32 %v332, 7
    %v334 = vsub.s32 0, %v333
    %v335 = vrot.slane %v330, %v334
    %v337 = vadd.f32 %v326, %v335
    %v338 = vadd.f32 %v327, %v335
    %v339 = vadd.f32 %v328, %v335
    %v340 = vadd.f32 %v329, %v335
    %v341 = vmax.f32 %v337, 0.0
    %v342 = vmax.f32 %v338, 0.0
    %v343 = vmax.f32 %v339, 0.0
    %v344 = vmax.f32 %v340, 0.0
    %v345 = vpack.c.bf16 %v342, %v341
    %v346 = vpack.c.bf16 %v344, %v343
    %v349 = vunpack.c.l.b16 %v345
    %v350 = vunpack.c.h.b16 %v345
    %v351 = vunpack.c.l.b16 %v346
    %v352 = vunpack.c.h.b16 %v346
    %v353 = vpack.c.b16 %v349, %v349
    %v354 = vpack.c.b16 %v350, %v350
    %v355 = vpack.c.b16 %v351, %v351
    %v356 = vpack.c.b16 %v352, %v352
    %vm361 = vcmask 257024
    %362 = vst.msk [vmem:[%s3] sm:$0xf] %vm361, %v353
    %363 = vst.msk [vmem:[%s3 + $0x4] sm:$0xf] %vm361, %v354
    %364 = vst.msk [vmem:[%s3 + $0x8] sm:$0xf] %vm361, %v355
    %365 = vst.msk [vmem:[%s3 + $0xc] sm:$0xf] %vm361, %v356
  $region21: #{single_task_model_forward.9} parent=0 // pred_fallthru
    _
  // Predicated region
  $region22: #{single_task_model_forward.9} parent=0 // pred_check
    _
  $region23: #{single_task_model_forward.9} parent=0 // pred_check_branch
    %367 = sbr.rel (0) target = $region25
  $region24: #{single_task_model_forward.9} parent=0 // pred_region
    _
  $region25: #{single_task_model_forward.9} parent=0 // pred_fallthru
    _
  // Predicated region
  $region26: #{single_task_model_forward.9} parent=0 // pred_check
    _
  $region27: #{single_task_model_forward.9} parent=0 // pred_check_branch
    %369 = sbr.rel (0) target = $region29
  $region28: #{single_task_model_forward.9} parent=0 // pred_region
    _
  $region29: #{single_task_model_forward.9} parent=0 // pred_fallthru
    _

// kernel: single_task_model_forward.12
$region0: #{single_task_model_forward.12}
  #allocation0 [shape = 'u32[]', space=smem, size = 0x4, offset = 0x4, fixed_abs, tag = 'smem constant byte address 0x4 - core index']
  #allocation1 [shape = 'u32[144,128]{1,0:T(1,128)}', space=vmem, size = 0x12000, scoped, tag = 'internal scratch']
  #allocation2 [shape = 'f32[16,40]{1,0:T(8,128)}', space=vmem, size = 0x2000, scoped, tag = 'scratch operand']
  %s0 = inlined_call_operand.vmem [shape: bf16[16,4], index: 0, kind: input, shape index: {}]
  %s1 = inlined_call_operand.vmem [shape: bf16[4,40], index: 1, kind: input, shape index: {}]
  %s2 = inlined_call_operand.vmem [shape: f32[1,40], index: 2, kind: input, shape index: {}]
  %s3 = inlined_call_operand.vmem [shape: f32[16,40], index: 3, kind: output, shape index: {}]
  %s4 = sld [smem:[#allocation0]]
  $region30: #{single_task_model_forward.12} parent=0
    _
  %s6 = ssub.s32 1, %s4
  %s7 = scalar_select 0, %s6, %s4
  // Predicated region
  $region2: #{single_task_model_forward.12} parent=0 // pred_check
    _
  $region3: #{single_task_model_forward.12} parent=0 // pred_check_branch
    %9 = sbr.rel (0) target = $region5
  $region4: #{single_task_model_forward.12} parent=0 // pred_region
    _
  $region5: #{single_task_model_forward.12} parent=0 // pred_fallthru
    _
  // Predicated region
  $region6: #{single_task_model_forward.12} parent=0 // pred_check
    _
  $region7: #{single_task_model_forward.12} parent=0 // pred_check_branch
    %11 = sbr.rel (0) target = $region9
  $region8: #{single_task_model_forward.12} parent=0 // pred_region
    _
  $region9: #{single_task_model_forward.12} parent=0 // pred_fallthru
    _
  // Predicated region
  $region10: #{single_task_model_forward.12} parent=0 // pred_check
    _
  $region11: #{single_task_model_forward.12} parent=0 // pred_check_branch
    %13 = sbr.rel (0) target = $region13
  $region12: #{single_task_model_forward.12} parent=0 // pred_region
    _
  $region13: #{single_task_model_forward.12} parent=0 // pred_fallthru
    _
  %p15 = scmp.eq.s32.totalorder 0, 0
  // Predicated region
  $region14: #{single_task_model_forward.12} parent=0 // pred_check
    %p16 = pneg %p15
  $region15: #{single_task_model_forward.12} parent=0 // pred_check_branch
    %18 = sbr.rel (%p16) target = $region17
  $region16: #{single_task_model_forward.12} parent=0 // pred_region
    %vm19 = vcmask 326656
    %20 = vst.msk [vmem:[#allocation2] sm:$0xff] %vm19, 0.0
    %21 = vst.msk [vmem:[#allocation2 + $0x8] sm:$0xff] %vm19, 0.0
  $region17: #{single_task_model_forward.12} parent=0 // pred_fallthru
    _
  %v22 = vld [vmem:[#allocation2] sm:$0xff]
  %v23 = vld [vmem:[#allocation2 + $0x8] sm:$0xff]
  %v24 = vld [vmem:[%s0] sm:$0xf]
  %v25 = vld [vmem:[%s0 + $0x4] sm:$0xf]
  %v26 = vld [vmem:[%s1] sm:$0x3]
  %v29 = vunpack.c.l.b16 %v24
  %v30 = vunpack.c.l.b16 %v25
  %v31 = vpack.c.b16 %v30, %v29
  %vm32 = vcmask 31744
  %v34 = vsel %vm32, %v31, 0
  %vm36 = vcmask 1041408
  %v38 = vsel %vm36, %v26, 0
  %40 = vmatprep.subr.bf16.mxu0 0
  %41 = vmatpush1.bf16.msra.mxu0 0
  %42 = vmatprep.subr.bf16.mxu0 0
  %43 = vmatpush1.bf16.msra.mxu0 0
  %44 = vmatprep.subr.bf16.mxu0 0
  %45 = vmatpush1.bf16.msra.mxu0 0
  %46 = vmatprep.subr.bf16.mxu0 0
  %47 = vmatpush1.bf16.msra.mxu0 0
  %48 = vmatprep.subr.bf16.mxu0 0
  %49 = vmatpush1.bf16.msra.mxu0 0
  %50 = vmatprep.subr.bf16.mxu0 0
  %51 = vmatpush1.bf16.msra.mxu0 0
  %52 = vmatprep.subr.bf16.mxu0 0
  %53 = vmatpush1.bf16.msra.mxu0 0
  %54 = vmatprep.subr.bf16.mxu0 0
  %55 = vmatpush1.bf16.msra.mxu0 %v38
  %56 = vmatprep.subr.bf16.mxu0 0
  %57 = vmatpush2.bf16.msra.mxu0 0
  %58 = vmatprep.subr.bf16.mxu0 0
  %59 = vmatpush2.bf16.msra.mxu0 0
  %60 = vmatprep.subr.bf16.mxu0 0
  %61 = vmatpush2.bf16.msra.mxu0 0
  %62 = vmatprep.subr.bf16.mxu0 0
  %63 = vmatpush2.bf16.msra.mxu0 0
  %64 = vmatprep.subr.bf16.mxu0 0
  %65 = vmatpush2.bf16.msra.mxu0 0
  %66 = vmatprep.subr.bf16.mxu0 0
  %67 = vmatpush2.bf16.msra.mxu0 0
  %68 = vmatprep.subr.bf16.mxu0 0
  %69 = vmatpush2.bf16.msra.mxu0 0
  %70 = vmatprep.subr.bf16.mxu0 0
  %71 = vmatpush2.bf16.msra.mxu0 0
  %72 = vmatprep.mubr.bf16.mxu0 0
  %73 = vmatmul.mubr.bf16.gmra.mxu0 %v34
  %v74 = vpop.f32.mrf.mxu0
  %v75 = vadd.f32 0.0, %v74
  %v76 = vpop.f32.mrf.mxu0
  %v77 = vpop.f32.mrf.mxu0
  %v78 = vadd.f32 0.0, %v77
  %v79 = vpop.f32.mrf.mxu0
  %80 = vdwg.mxu0
  %v81 = vadd.f32 %v22, %v75
  %v82 = vadd.f32 %v23, %v78
  %vm83 = vcmask 326656
  %84 = vst.msk [vmem:[#allocation2] sm:$0xff] %vm83, %v81
  %85 = vst.msk [vmem:[#allocation2 + $0x8] sm:$0xff] %vm83, %v82
  // Predicated region
  $region18: #{single_task_model_forward.12} parent=0 // pred_check
    %p86 = pneg %p15
  $region19: #{single_task_model_forward.12} parent=0 // pred_check_branch
    %88 = sbr.rel (%p86) target = $region21
  $region20: #{single_task_model_forward.12} parent=0 // pred_region
    %v89 = vld [vmem:[#allocation2] sm:$0xff]
    %v90 = vld [vmem:[#allocation2 + $0x8] sm:$0xff]
    %v91 = vld [vmem:[%s2] sm:$0x1]
    %v93 = vlaneseq
    %v94 = vshrl.u32 %v93, 7
    %v95 = vsub.s32 0, %v94
    %v96 = vrot.slane %v91, %v95
    %v98 = vadd.f32 %v89, %v96
    %v99 = vadd.f32 %v90, %v96
    %100 = vst.msk [vmem:[%s3] sm:$0xff] %vm83, %v98
    %101 = vst.msk [vmem:[%s3 + $0x8] sm:$0xff] %vm83, %v99
  $region21: #{single_task_model_forward.12} parent=0 // pred_fallthru
    _
  // Predicated region
  $region22: #{single_task_model_forward.12} parent=0 // pred_check
    _
  $region23: #{single_task_model_forward.12} parent=0 // pred_check_branch
    %103 = sbr.rel (0) target = $region25
  $region24: #{single_task_model_forward.12} parent=0 // pred_region
    _
  $region25: #{single_task_model_forward.12} parent=0 // pred_fallthru
    _
  // Predicated region
  $region26: #{single_task_model_forward.12} parent=0 // pred_check
    _
  $region27: #{single_task_model_forward.12} parent=0 // pred_check_branch
    %105 = sbr.rel (0) target = $region29
  $region28: #{single_task_model_forward.12} parent=0 // pred_region
    _
  $region29: #{single_task_model_forward.12} parent=0 // pred_fallthru
    _

// kernel: single_task_model_forward.13
$region0: #{single_task_model_forward.13}
  #allocation0 [shape = 'u32[]', space=smem, size = 0x4, offset = 0x4, fixed_abs, tag = 'smem constant byte address 0x4 - core index']
  #allocation1 [shape = 'u32[144,128]{1,0:T(1,128)}', space=vmem, size = 0x12000, scoped, tag = 'internal scratch']
  #allocation2 [shape = 'f32[160,16]{1,0:T(8,128)}', space=vmem, size = 0x14000, scoped, tag = 'scratch operand']
  %s0 = inlined_call_operand.vmem [shape: bf16[160,4], index: 0, kind: input, shape index: {}]
  %s1 = inlined_call_operand.vmem [shape: bf16[4,16], index: 1, kind: input, shape index: {}]
  %s2 = inlined_call_operand.vmem [shape: f32[1,16], index: 2, kind: input, shape index: {}]
  %s3 = inlined_call_operand.hbm [shape: f32[160,16], index: 3, kind: output, shape index: {}]
  %s4 = sld [smem:[#allocation0]]
  $region30: #{single_task_model_forward.13} parent=0
    _
  %s6 = ssub.s32 1, %s4
  %s7 = scalar_select 0, %s6, %s4
  $region1: #{single_task_model_forward.13} parent=0
    #allocation3 [shape = 'u8[81920]{0}', space=vmem, size = 0x14000, scoped, tag = 'output window, operand 0, single buffered']
    #allocation4 [shape = 's32[1]{0}', space=sflag, size = 0x4, scoped, tag = 'scoped memory for single_task_model_forward.13']
    %8 = vsyncpa [#allocation4], 0
    // Predicated region
    $region2: #{single_task_model_forward.13} parent=1 // pred_check
      _
    $region3: #{single_task_model_forward.13} parent=1 // pred_check_branch
      %10 = sbr.rel (0) target = $region5
    $region4: #{single_task_model_forward.13} parent=1 // pred_region
      _
    $region5: #{single_task_model_forward.13} parent=1 // pred_fallthru
      _
    // Predicated region
    $region6: #{single_task_model_forward.13} parent=1 // pred_check
      _
    $region7: #{single_task_model_forward.13} parent=1 // pred_check_branch
      %12 = sbr.rel (0) target = $region9
    $region8: #{single_task_model_forward.13} parent=1 // pred_region
      _
    $region9: #{single_task_model_forward.13} parent=1 // pred_fallthru
      _
    // Predicated region
    $region10: #{single_task_model_forward.13} parent=1 // pred_check
      _
    $region11: #{single_task_model_forward.13} parent=1 // pred_check_branch
      %14 = sbr.rel (0) target = $region13
    $region12: #{single_task_model_forward.13} parent=1 // pred_region
      _
    $region13: #{single_task_model_forward.13} parent=1 // pred_fallthru
      _
    %p16 = scmp.eq.s32.totalorder 0, 0
    // Predicated region
    $region14: #{single_task_model_forward.13} parent=1 // pred_check
      %p17 = pneg %p16
    $region15: #{single_task_model_forward.13} parent=1 // pred_check_branch
      %19 = sbr.rel (%p17) target = $region17
    $region16: #{single_task_model_forward.13} parent=1 // pred_region
      %vm20 = vcmask 130048
      %21 = vst.msk [vmem:[#allocation2] sm:$0xff] %vm20, 0.0
      %22 = vst.msk [vmem:[#allocation2 + $0x8] sm:$0xff] %vm20, 0.0
      %23 = vst.msk [vmem:[#allocation2 + $0x10] sm:$0xff] %vm20, 0.0
      %24 = vst.msk [vmem:[#allocation2 + $0x18] sm:$0xff] %vm20, 0.0
      %25 = vst.msk [vmem:[#allocation2 + $0x20] sm:$0xff] %vm20, 0.0
      %26 = vst.msk [vmem:[#allocation2 + $0x28] sm:$0xff] %vm20, 0.0
      %27 = vst.msk [vmem:[#allocation2 + $0x30] sm:$0xff] %vm20, 0.0
      %28 = vst.msk [vmem:[#allocation2 + $0x38] sm:$0xff] %vm20, 0.0
      %29 = vst.msk [vmem:[#allocation2 + $0x40] sm:$0xff] %vm20, 0.0
      %30 = vst.msk [vmem:[#allocation2 + $0x48] sm:$0xff] %vm20, 0.0
      %31 = vst.msk [vmem:[#allocation2 + $0x50] sm:$0xff] %vm20, 0.0
      %32 = vst.msk [vmem:[#allocation2 + $0x58] sm:$0xff] %vm20, 0.0
      %33 = vst.msk [vmem:[#allocation2 + $0x60] sm:$0xff] %vm20, 0.0
      %34 = vst.msk [vmem:[#allocation2 + $0x68] sm:$0xff] %vm20, 0.0
      %35 = vst.msk [vmem:[#allocation2 + $0x70] sm:$0xff] %vm20, 0.0
      %36 = vst.msk [vmem:[#allocation2 + $0x78] sm:$0xff] %vm20, 0.0
      %37 = vst.msk [vmem:[#allocation2 + $0x80] sm:$0xff] %vm20, 0.0
      %38 = vst.msk [vmem:[#allocation2 + $0x88] sm:$0xff] %vm20, 0.0
      %39 = vst.msk [vmem:[#allocation2 + $0x90] sm:$0xff] %vm20, 0.0
      %40 = vst.msk [vmem:[#allocation2 + $0x98] sm:$0xff] %vm20, 0.0
    $region17: #{single_task_model_forward.13} parent=1 // pred_fallthru
      _
    %v41 = vld [vmem:[#allocation2] sm:$0xff]
    %v42 = vld [vmem:[#allocation2 + $0x8] sm:$0xff]
    %v43 = vld [vmem:[#allocation2 + $0x10] sm:$0xff]
    %v44 = vld [vmem:[#allocation2 + $0x18] sm:$0xff]
    %v45 = vld [vmem:[#allocation2 + $0x20] sm:$0xff]
    %v46 = vld [vmem:[#allocation2 + $0x28] sm:$0xff]
    %v47 = vld [vmem:[#allocation2 + $0x30] sm:$0xff]
    %v48 = vld [vmem:[#allocation2 + $0x38] sm:$0xff]
    %v49 = vld [vmem:[#allocation2 + $0x40] sm:$0xff]
    %v50 = vld [vmem:[#allocation2 + $0x48] sm:$0xff]
    %v51 = vld [vmem:[#allocation2 + $0x50] sm:$0xff]
    %v52 = vld [vmem:[#allocation2 + $0x58] sm:$0xff]
    %v53 = vld [vmem:[#allocation2 + $0x60] sm:$0xff]
    %v54 = vld [vmem:[#allocation2 + $0x68] sm:$0xff]
    %v55 = vld [vmem:[#allocation2 + $0x70] sm:$0xff]
    %v56 = vld [vmem:[#allocation2 + $0x78] sm:$0xff]
    %v57 = vld [vmem:[#allocation2 + $0x80] sm:$0xff]
    %v58 = vld [vmem:[#allocation2 + $0x88] sm:$0xff]
    %v59 = vld [vmem:[#allocation2 + $0x90] sm:$0xff]
    %v60 = vld [vmem:[#allocation2 + $0x98] sm:$0xff]
    %v61 = vld [vmem:[%s0] sm:$0xf]
    %v62 = vld [vmem:[%s0 + $0x4] sm:$0xf]
    %v63 = vld [vmem:[%s0 + $0x8] sm:$0xf]
    %v64 = vld [vmem:[%s0 + $0xc] sm:$0xf]
    %v65 = vld [vmem:[%s0 + $0x10] sm:$0xf]
    %v66 = vld [vmem:[%s0 + $0x14] sm:$0xf]
    %v67 = vld [vmem:[%s0 + $0x18] sm:$0xf]
    %v68 = vld [vmem:[%s0 + $0x1c] sm:$0xf]
    %v69 = vld [vmem:[%s0 + $0x20] sm:$0xf]
    %v70 = vld [vmem:[%s0 + $0x24] sm:$0xf]
    %v71 = vld [vmem:[%s0 + $0x28] sm:$0xf]
    %v72 = vld [vmem:[%s0 + $0x2c] sm:$0xf]
    %v73 = vld [vmem:[%s0 + $0x30] sm:$0xf]
    %v74 = vld [vmem:[%s0 + $0x34] sm:$0xf]
    %v75 = vld [vmem:[%s0 + $0x38] sm:$0xf]
    %v76 = vld [vmem:[%s0 + $0x3c] sm:$0xf]
    %v77 = vld [vmem:[%s0 + $0x40] sm:$0xf]
    %v78 = vld [vmem:[%s0 + $0x44] sm:$0xf]
    %v79 = vld [vmem:[%s0 + $0x48] sm:$0xf]
    %v80 = vld [vmem:[%s0 + $0x4c] sm:$0xf]
    %v81 = vld [vmem:[%s1] sm:$0x3]
    %v102 = vunpack.c.l.b16 %v61
    %v103 = vunpack.c.l.b16 %v62
    %v104 = vunpack.c.l.b16 %v63
    %v105 = vunpack.c.l.b16 %v64
    %v106 = vunpack.c.l.b16 %v65
    %v107 = vunpack.c.l.b16 %v66
    %v108 = vunpack.c.l.b16 %v67
    %v109 = vunpack.c.l.b16 %v68
    %v110 = vunpack.c.l.b16 %v69
    %v111 = vunpack.c.l.b16 %v70
    %v112 = vunpack.c.l.b16 %v71
    %v113 = vunpack.c.l.b16 %v72
    %v114 = vunpack.c.l.b16 %v73
    %v115 = vunpack.c.l.b16 %v74
    %v116 = vunpack.c.l.b16 %v75
    %v117 = vunpack.c.l.b16 %v76
    %v118 = vunpack.c.l.b16 %v77
    %v119 = vunpack.c.l.b16 %v78
    %v120 = vunpack.c.l.b16 %v79
    %v121 = vunpack.c.l.b16 %v80
    %v122 = vpack.c.b16 %v103, %v102
    %v123 = vpack.c.b16 %v105, %v104
    %v124 = vpack.c.b16 %v107, %v106
    %v125 = vpack.c.b16 %v109, %v108
    %v126 = vpack.c.b16 %v111, %v110
    %v127 = vpack.c.b16 %v113, %v112
    %v128 = vpack.c.b16 %v115, %v114
    %v129 = vpack.c.b16 %v117, %v116
    %v130 = vpack.c.b16 %v119, %v118
    %v131 = vpack.c.b16 %v121, %v120
    %vm132 = vcmask 31744
    %v134 = vsel %vm132, %v122, 0
    %v137 = vsel %vm132, %v123, 0
    %v140 = vsel %vm132, %v124, 0
    %v143 = vsel %vm132, %v125, 0
    %v146 = vsel %vm132, %v126, 0
    %v149 = vsel %vm132, %v127, 0
    %v152 = vsel %vm132, %v128, 0
    %v155 = vsel %vm132, %v129, 0
    %v158 = vsel %vm132, %v130, 0
    %v161 = vsel %vm132, %v131, 0
    %vm163 = vcmask 1041408
    %v165 = vsel %vm163, %v81, 0
    %167 = vmatprep.subr.bf16.mxu0 0
    %168 = vmatpush1.bf16.msra.mxu0 0
    %169 = vmatprep.subr.bf16.mxu0 0
    %170 = vmatpush1.bf16.msra.mxu0 0
    %171 = vmatprep.subr.bf16.mxu0 0
    %172 = vmatpush1.bf16.msra.mxu0 0
    %173 = vmatprep.subr.bf16.mxu0 0
    %174 = vmatpush1.bf16.msra.mxu0 0
    %175 = vmatprep.subr.bf16.mxu0 0
    %176 = vmatpush1.bf16.msra.mxu0 0
    %177 = vmatprep.subr.bf16.mxu0 0
    %178 = vmatpush1.bf16.msra.mxu0 0
    %179 = vmatprep.subr.bf16.mxu0 0
    %180 = vmatpush1.bf16.msra.mxu0 0
    %181 = vmatprep.subr.bf16.mxu0 0
    %182 = vmatpush1.bf16.msra.mxu0 %v165
    %183 = vmatprep.subr.bf16.mxu0 0
    %184 = vmatpush2.bf16.msra.mxu0 0
    %185 = vmatprep.subr.bf16.mxu0 0
    %186 = vmatpush2.bf16.msra.mxu0 0
    %187 = vmatprep.subr.bf16.mxu0 0
    %188 = vmatpush2.bf16.msra.mxu0 0
    %189 = vmatprep.subr.bf16.mxu0 0
    %190 = vmatpush2.bf16.msra.mxu0 0
    %191 = vmatprep.subr.bf16.mxu0 0
    %192 = vmatpush2.bf16.msra.mxu0 0
    %193 = vmatprep.subr.bf16.mxu0 0
    %194 = vmatpush2.bf16.msra.mxu0 0
    %195 = vmatprep.subr.bf16.mxu0 0
    %196 = vmatpush2.bf16.msra.mxu0 0
    %197 = vmatprep.subr.bf16.mxu0 0
    %198 = vmatpush2.bf16.msra.mxu0 0
    %199 = vmatprep.mubr.bf16.mxu0 0
    %200 = vmatmul.mubr.bf16.gmra.mxu0 %v134
    %v201 = vpop.f32.mrf.mxu0
    %v202 = vadd.f32 0.0, %v201
    %v203 = vpop.f32.mrf.mxu0
    %v204 = vpop.f32.mrf.mxu0
    %v205 = vadd.f32 0.0, %v204
    %v206 = vpop.f32.mrf.mxu0
    %207 = vmatprep.mubr.bf16.mxu0 0
    %208 = vmatmul.mubr.bf16.gmra.mxu0 %v137
    %v209 = vpop.f32.mrf.mxu0
    %v210 = vadd.f32 0.0, %v209
    %v211 = vpop.f32.mrf.mxu0
    %v212 = vpop.f32.mrf.mxu0
    %v213 = vadd.f32 0.0, %v212
    %v214 = vpop.f32.mrf.mxu0
    %215 = vmatprep.mubr.bf16.mxu0 0
    %216 = vmatmul.mubr.bf16.gmra.mxu0 %v140
    %v217 = vpop.f32.mrf.mxu0
    %v218 = vadd.f32 0.0, %v217
    %v219 = vpop.f32.mrf.mxu0
    %v220 = vpop.f32.mrf.mxu0
    %v221 = vadd.f32 0.0, %v220
    %v222 = vpop.f32.mrf.mxu0
    %223 = vmatprep.mubr.bf16.mxu0 0
    %224 = vmatmul.mubr.bf16.gmra.mxu0 %v143
    %v225 = vpop.f32.mrf.mxu0
    %v226 = vadd.f32 0.0, %v225
    %v227 = vpop.f32.mrf.mxu0
    %v228 = vpop.f32.mrf.mxu0
    %v229 = vadd.f32 0.0, %v228
    %v230 = vpop.f32.mrf.mxu0
    %231 = vmatprep.mubr.bf16.mxu0 0
    %232 = vmatmul.mubr.bf16.gmra.mxu0 %v146
    %v233 = vpop.f32.mrf.mxu0
    %v234 = vadd.f32 0.0, %v233
    %v235 = vpop.f32.mrf.mxu0
    %v236 = vpop.f32.mrf.mxu0
    %v237 = vadd.f32 0.0, %v236
    %v238 = vpop.f32.mrf.mxu0
    %239 = vmatprep.mubr.bf16.mxu0 0
    %240 = vmatmul.mubr.bf16.gmra.mxu0 %v149
    %v241 = vpop.f32.mrf.mxu0
    %v242 = vadd.f32 0.0, %v241
    %v243 = vpop.f32.mrf.mxu0
    %v244 = vpop.f32.mrf.mxu0
    %v245 = vadd.f32 0.0, %v244
    %v246 = vpop.f32.mrf.mxu0
    %247 = vmatprep.mubr.bf16.mxu0 0
    %248 = vmatmul.mubr.bf16.gmra.mxu0 %v152
    %v249 = vpop.f32.mrf.mxu0
    %v250 = vadd.f32 0.0, %v249
    %v251 = vpop.f32.mrf.mxu0
    %v252 = vpop.f32.mrf.mxu0
    %v253 = vadd.f32 0.0, %v252
    %v254 = vpop.f32.mrf.mxu0
    %255 = vmatprep.mubr.bf16.mxu0 0
    %256 = vmatmul.mubr.bf16.gmra.mxu0 %v155
    %v257 = vpop.f32.mrf.mxu0
    %v258 = vadd.f32 0.0, %v257
    %v259 = vpop.f32.mrf.mxu0
    %v260 = vpop.f32.mrf.mxu0
    %v261 = vadd.f32 0.0, %v260
    %v262 = vpop.f32.mrf.mxu0
    %263 = vmatprep.mubr.bf16.mxu0 0
    %264 = vmatmul.mubr.bf16.gmra.mxu0 %v158
    %v265 = vpop.f32.mrf.mxu0
    %v266 = vadd.f32 0.0, %v265
    %v267 = vpop.f32.mrf.mxu0
    %v268 = vpop.f32.mrf.mxu0
    %v269 = vadd.f32 0.0, %v268
    %v270 = vpop.f32.mrf.mxu0
    %271 = vmatprep.mubr.bf16.mxu0 0
    %272 = vmatmul.mubr.bf16.gmra.mxu0 %v161
    %v273 = vpop.f32.mrf.mxu0
    %v274 = vadd.f32 0.0, %v273
    %v275 = vpop.f32.mrf.mxu0
    %v276 = vpop.f32.mrf.mxu0
    %v277 = vadd.f32 0.0, %v276
    %v278 = vpop.f32.mrf.mxu0
    %279 = vdwg.mxu0
    %v280 = vadd.f32 %v41, %v202
    %v281 = vadd.f32 %v42, %v205
    %v282 = vadd.f32 %v43, %v210
    %v283 = vadd.f32 %v44, %v213
    %v284 = vadd.f32 %v45, %v218
    %v285 = vadd.f32 %v46, %v221
    %v286 = vadd.f32 %v47, %v226
    %v287 = vadd.f32 %v48, %v229
    %v288 = vadd.f32 %v49, %v234
    %v289 = vadd.f32 %v50, %v237
    %v290 = vadd.f32 %v51, %v242
    %v291 = vadd.f32 %v52, %v245
    %v292 = vadd.f32 %v53, %v250
    %v293 = vadd.f32 %v54, %v253
    %v294 = vadd.f32 %v55, %v258
    %v295 = vadd.f32 %v56, %v261
    %v296 = vadd.f32 %v57, %v266
    %v297 = vadd.f32 %v58, %v269
    %v298 = vadd.f32 %v59, %v274
    %v299 = vadd.f32 %v60, %v277
    %vm300 = vcmask 130048
    %301 = vst.msk [vmem:[#allocation2] sm:$0xff] %vm300, %v280
    %302 = vst.msk [vmem:[#allocation2 + $0x8] sm:$0xff] %vm300, %v281
    %303 = vst.msk [vmem:[#allocation2 + $0x10] sm:$0xff] %vm300, %v282
    %304 = vst.msk [vmem:[#allocation2 + $0x18] sm:$0xff] %vm300, %v283
    %305 = vst.msk [vmem:[#allocation2 + $0x20] sm:$0xff] %vm300, %v284
    %306 = vst.msk [vmem:[#allocation2 + $0x28] sm:$0xff] %vm300, %v285
    %307 = vst.msk [vmem:[#allocation2 + $0x30] sm:$0xff] %vm300, %v286
    %308 = vst.msk [vmem:[#allocation2 + $0x38] sm:$0xff] %vm300, %v287
    %309 = vst.msk [vmem:[#allocation2 + $0x40] sm:$0xff] %vm300, %v288
    %310 = vst.msk [vmem:[#allocation2 + $0x48] sm:$0xff] %vm300, %v289
    %311 = vst.msk [vmem:[#allocation2 + $0x50] sm:$0xff] %vm300, %v290
    %312 = vst.msk [vmem:[#allocation2 + $0x58] sm:$0xff] %vm300, %v291
    %313 = vst.msk [vmem:[#allocation2 + $0x60] sm:$0xff] %vm300, %v292
    %314 = vst.msk [vmem:[#allocation2 + $0x68] sm:$0xff] %vm300, %v293
    %315 = vst.msk [vmem:[#allocation2 + $0x70] sm:$0xff] %vm300, %v294
    %316 = vst.msk [vmem:[#allocation2 + $0x78] sm:$0xff] %vm300, %v295
    %317 = vst.msk [vmem:[#allocation2 + $0x80] sm:$0xff] %vm300, %v296
    %318 = vst.msk [vmem:[#allocation2 + $0x88] sm:$0xff] %vm300, %v297
    %319 = vst.msk [vmem:[#allocation2 + $0x90] sm:$0xff] %vm300, %v298
    %320 = vst.msk [vmem:[#allocation2 + $0x98] sm:$0xff] %vm300, %v299
    // Predicated region
    $region18: #{single_task_model_forward.13} parent=1 // pred_check
      %p321 = pneg %p16
    $region19: #{single_task_model_forward.13} parent=1 // pred_check_branch
      %323 = sbr.rel (%p321) target = $region21
    $region20: #{single_task_model_forward.13} parent=1 // pred_region
      %v324 = vld [vmem:[#allocation2] sm:$0xff]
      %v325 = vld [vmem:[#allocation2 + $0x8] sm:$0xff]
      %v326 = vld [vmem:[#allocation2 + $0x10] sm:$0xff]
      %v327 = vld [vmem:[#allocation2 + $0x18] sm:$0xff]
      %v328 = vld [vmem:[#allocation2 + $0x20] sm:$0xff]
      %v329 = vld [vmem:[#allocation2 + $0x28] sm:$0xff]
      %v330 = vld [vmem:[#allocation2 + $0x30] sm:$0xff]
      %v331 = vld [vmem:[#allocation2 + $0x38] sm:$0xff]
      %v332 = vld [vmem:[#allocation2 + $0x40] sm:$0xff]
      %v333 = vld [vmem:[#allocation2 + $0x48] sm:$0xff]
      %v334 = vld [vmem:[#allocation2 + $0x50] sm:$0xff]
      %v335 = vld [vmem:[#allocation2 + $0x58] sm:$0xff]
      %v336 = vld [vmem:[#allocation2 + $0x60] sm:$0xff]
      %v337 = vld [vmem:[#allocation2 + $0x68] sm:$0xff]
      %v338 = vld [vmem:[#allocation2 + $0x70] sm:$0xff]
      %v339 = vld [vmem:[#allocation2 + $0x78] sm:$0xff]
      %v340 = vld [vmem:[#allocation2 + $0x80] sm:$0xff]
      %v341 = vld [vmem:[#allocation2 + $0x88] sm:$0xff]
      %v342 = vld [vmem:[#allocation2 + $0x90] sm:$0xff]
      %v343 = vld [vmem:[#allocation2 + $0x98] sm:$0xff]
      %v344 = vld [vmem:[%s2] sm:$0x1]
      %v346 = vlaneseq
      %v347 = vshrl.u32 %v346, 7
      %v348 = vsub.s32 0, %v347
      %v349 = vrot.slane %v344, %v348
      %v351 = vadd.f32 %v324, %v349
      %v352 = vadd.f32 %v325, %v349
      %v353 = vadd.f32 %v326, %v349
      %v354 = vadd.f32 %v327, %v349
      %v355 = vadd.f32 %v328, %v349
      %v356 = vadd.f32 %v329, %v349
      %v357 = vadd.f32 %v330, %v349
      %v358 = vadd.f32 %v331, %v349
      %v359 = vadd.f32 %v332, %v349
      %v360 = vadd.f32 %v333, %v349
      %v361 = vadd.f32 %v334, %v349
      %v362 = vadd.f32 %v335, %v349
      %v363 = vadd.f32 %v336, %v349
      %v364 = vadd.f32 %v337, %v349
      %v365 = vadd.f32 %v338, %v349
      %v366 = vadd.f32 %v339, %v349
      %v367 = vadd.f32 %v340, %v349
      %v368 = vadd.f32 %v341, %v349
      %v369 = vadd.f32 %v342, %v349
      %v370 = vadd.f32 %v343, %v349
      %371 = vst.msk [vmem:[#allocation3] sm:$0xff] %vm300, %v351
      %372 = vst.msk [vmem:[#allocation3 + $0x8] sm:$0xff] %vm300, %v352
      %373 = vst.msk [vmem:[#allocation3 + $0x10] sm:$0xff] %vm300, %v353
      %374 = vst.msk [vmem:[#allocation3 + $0x18] sm:$0xff] %vm300, %v354
      %375 = vst.msk [vmem:[#allocation3 + $0x20] sm:$0xff] %vm300, %v355
      %376 = vst.msk [vmem:[#allocation3 + $0x28] sm:$0xff] %vm300, %v356
      %377 = vst.msk [vmem:[#allocation3 + $0x30] sm:$0xff] %vm300, %v357
      %378 = vst.msk [vmem:[#allocation3 + $0x38] sm:$0xff] %vm300, %v358
      %379 = vst.msk [vmem:[#allocation3 + $0x40] sm:$0xff] %vm300, %v359
      %380 = vst.msk [vmem:[#allocation3 + $0x48] sm:$0xff] %vm300, %v360
      %381 = vst.msk [vmem:[#allocation3 + $0x50] sm:$0xff] %vm300, %v361
      %382 = vst.msk [vmem:[#allocation3 + $0x58] sm:$0xff] %vm300, %v362
      %383 = vst.msk [vmem:[#allocation3 + $0x60] sm:$0xff] %vm300, %v363
      %384 = vst.msk [vmem:[#allocation3 + $0x68] sm:$0xff] %vm300, %v364
      %385 = vst.msk [vmem:[#allocation3 + $0x70] sm:$0xff] %vm300, %v365
      %386 = vst.msk [vmem:[#allocation3 + $0x78] sm:$0xff] %vm300, %v366
      %387 = vst.msk [vmem:[#allocation3 + $0x80] sm:$0xff] %vm300, %v367
      %388 = vst.msk [vmem:[#allocation3 + $0x88] sm:$0xff] %vm300, %v368
      %389 = vst.msk [vmem:[#allocation3 + $0x90] sm:$0xff] %vm300, %v369
      %390 = vst.msk [vmem:[#allocation3 + $0x98] sm:$0xff] %vm300, %v370
    $region21: #{single_task_model_forward.13} parent=1 // pred_fallthru
      _
    // Predicated region
    $region22: #{single_task_model_forward.13} parent=1 // pred_check
      _
    $region23: #{single_task_model_forward.13} parent=1 // pred_check_branch
      %392 = sbr.rel (0) target = $region25
    $region24: #{single_task_model_forward.13} parent=1 // pred_region
      %s394 = ssub.s32 2560, 2560
      %395 = vsyncadd [#allocation4], %s394
      %s396 = sshll.u32 [#allocation3], 4
      %s397 = int_to_ptr.vmem [resolvable:$true] %s396
      %402 = dma.vmem_to_hbm [thread:$0]  %s397, 2560, %s3, [#allocation4], 128, 128, 8
    $region25: #{single_task_model_forward.13} parent=1 // pred_fallthru
      _
    // Predicated region
    $region26: #{single_task_model_forward.13} parent=1 // pred_check
      _
    $region27: #{single_task_model_forward.13} parent=1 // pred_check_branch
      %404 = sbr.rel (0) target = $region29
    $region28: #{single_task_model_forward.13} parent=1 // pred_region
      %405 = dma.done [#allocation4], 2560
    $region29: #{single_task_model_forward.13} parent=1 // pred_fallthru
      _
    %406 = vsyncpa [#allocation4], 1

</llo_original>
